<compile_context>
chip_gen: v7x
topology: tpu7x:2x2x1
jax: 0.10.0
libtpu: 0.0.40
codegen_flags: <defaults>
</compile_context>

<pallas_src>
import math
from functools import partial

import jax
import jax.numpy as jnp
import numpy as np
from jax.experimental import pallas as pl
from jax.experimental.pallas import tpu as pltpu


def _mha_kernel(num_heads, q_ref, k_ref, v_ref, wq_ref, wk_ref, wv_ref,
                wo_ref, bo_ref, o_ref, k_cache, v_cache):
    # q_ref          : (Bq, D)   query rows of this grid step (batch dim squeezed)
    # k_ref, v_ref   : (S,  D)   full key/value sequence for this batch element
    # wq/wk/wv_ref   : (D,  D)   concatenated projection weights, x @ W.T layout
    #                            (1/sqrt(d_k) already folded into wq)
    # wo_ref         : (D,  D)   output projection, x @ W.T layout
    # bo_ref         : (1,  D)
    # o_ref          : (Bq, D)
    # k_cache,v_cache: (S,  D)   VMEM scratch: projected K/V, written once per batch
    seq_len, d_model = k_ref.shape
    d_k = d_model // num_heads
    in_dtype = q_ref.dtype

    # ---- K/V projection: one full-width MXU matmul each, computed only for the
    #      first q-block of a batch element and cached for all later q-blocks. ----
    @pl.when(pl.program_id(1) == 0)
    def _project_kv():
        k_cache[...] = jnp.dot(k_ref[...], wk_ref[...],
                               preferred_element_type=jnp.float32).astype(in_dtype)
        v_cache[...] = jnp.dot(v_ref[...], wv_ref[...],
                               preferred_element_type=jnp.float32).astype(in_dtype)

    # ---- Q projection (scale pre-folded): one full-width matmul, f32 accumulate,
    #      operands stay in the activation dtype for the MXU. ----
    q = jnp.dot(q_ref[...], wq_ref[...],
                preferred_element_type=jnp.float32).astype(in_dtype)       # (Bq, D)

    # ---- Attention core, one head at a time (static unroll).  Only a (Bq, S)
    #      f32 score tile is live per head; head slices are static lane slices. ----
    ctx_heads = []
    for h in range(num_heads):
        lo, hi = h * d_k, (h + 1) * d_k
        q_h = q[:, lo:hi]                                                  # (Bq, d_k)
        k_h = k_cache[:, lo:hi]                                            # (S,  d_k)
        v_h = v_cache[:, lo:hi]                                            # (S,  d_k)

        s = jnp.dot(q_h, k_h.T, preferred_element_type=jnp.float32)        # (Bq, S)
        # Numerically stable, exact softmax in f32 (exp on the EUP is the
        # critical slot on v6e/v7x; the divide/VPU work hides under it).
        s = s - jnp.max(s, axis=-1, keepdims=True)
        p = jnp.exp(s)
        p = p * (1.0 / jnp.sum(p, axis=-1, keepdims=True))
        # TODO(synk): mask=None path only; dropout(p) is identity in eval mode.

        ctx_heads.append(
            jnp.dot(p.astype(in_dtype), v_h,
                    preferred_element_type=jnp.float32).astype(in_dtype))  # (Bq, d_k)

    # ---- Fused output projection: merge heads into the lane axis once, then a
    #      single full-width (Bq, D) @ (D, D) matmul (effective K = H*d_k = D). ----
    ctx = jnp.concatenate(ctx_heads, axis=-1)                              # (Bq, D)
    out = jnp.dot(ctx, wo_ref[...], preferred_element_type=jnp.float32)
    o_ref[...] = (out + bo_ref[...].astype(jnp.float32)).astype(o_ref.dtype)


def prepare_mha_params(params, num_heads, dtype):
    """Trace-time weight layout prep (hoist this out of the per-forward path).

    nn.Linear stores weight as (out, in); we project as x @ W.T.  The 1/sqrt(d_k)
    score scale is folded into the Q weight, and weights are cast to the
    activation dtype so bf16 models hit the bf16 MXU rate.
    """
    d_model = params["wq"].shape[0]
    assert d_model % num_heads == 0
    d_k = d_model // num_heads
    scale = 1.0 / math.sqrt(d_k)
    return {
        "wq": (params["wq"] * scale).T.astype(dtype),
        "wk": params["wk"].T.astype(dtype),
        "wv": params["wv"].T.astype(dtype),
        "wo": params["wo"].T.astype(dtype),
        "bo": params["bo"].reshape(1, d_model).astype(jnp.float32),
    }


def _vmem_limit_bytes():
    """Generation-aware scoped-VMEM limit (~112 MiB on 128 MiB chips, ~48 MiB on v7x)."""
    cap = 64 * 1024 * 1024
    try:
        cap = int(pltpu.get_tpu_info().vmem_capacity_bytes)
    except Exception:
        pass
    if cap >= 128 * 1024 * 1024:          # v5e / v6e
        return 112 * 1024 * 1024
    return max(min(cap - 16 * 1024 * 1024, (cap * 3) // 4), 32 * 1024 * 1024)  # v7x


def _pick_block_q(seq_len, d_model, num_heads, d_k, itemsize, vmem_limit):
    """Largest query tile whose estimated per-step VMEM footprint fits the budget."""
    budget = int(vmem_limit * 0.6)        # headroom for compiler temporaries

    def footprint(bq):
        acts = 2 * (2 * bq * d_model + 2 * seq_len * d_model) * itemsize  # q/o + k/v (dbl-buf)
        wts = 2 * 4 * d_model * d_model * itemsize + 4 * d_model          # weights (dbl-buf) + bias
        cache = 2 * seq_len * d_model * itemsize                          # K/V scratch
        scores = 2 * bq * seq_len * (4 + itemsize)                        # ~2 heads of s/p live
        ctx = bq * d_model * (itemsize + 4)                               # merged ctx + f32 out
        return acts + wts + cache + scores + ctx

    if footprint(seq_len) <= budget:
        return seq_len                    # whole sequence per step
    for cand in (1024, 512, 256, 128):
        if seq_len % cand == 0 and footprint(cand) <= budget:
            return cand
    for cand in (128, 256, 512, 1024):
        if seq_len % cand == 0:
            return cand
    # TODO(synk): very long / irregular S needs flash-style K/V streaming.
    return seq_len


def multi_head_attention(query, key, value, params, num_heads, *,
                         block_q=None, prepared=False):
    """query/key/value: (B, S, d_model). params: torch-layout weights, or the
    output of prepare_mha_params if prepared=True (hoisted weight prep)."""
    B, S, D = query.shape
    assert D % num_heads == 0
    d_k = D // num_heads

    w = params if prepared else prepare_mha_params(params, num_heads, query.dtype)

    vmem_limit = _vmem_limit_bytes()
    itemsize = query.dtype.itemsize
    if block_q is None:
        block_q = _pick_block_q(S, D, num_heads, d_k, itemsize, vmem_limit)
    assert S % block_q == 0
    n_q = S // block_q

    q_spec = pl.BlockSpec((None, block_q, D), lambda b, i: (b, i, 0))
    kv_spec = pl.BlockSpec((None, S, D), lambda b, i: (b, 0, 0))
    w_spec = pl.BlockSpec((D, D), lambda b, i: (0, 0))
    b_spec = pl.BlockSpec((1, D), lambda b, i: (0, 0))
    o_spec = pl.BlockSpec((None, block_q, D), lambda b, i: (b, i, 0))

    # Advisory cost estimate for XLA scheduling around the custom call.
    flops = 8 * B * S * D * D + 4 * B * S * S * D          # projections + attention
    cost = pl.CostEstimate(
        flops=int(flops),
        transcendentals=int(B * num_heads * S * S),        # softmax exp
        bytes_accessed=int((4 * B * S * D + 4 * D * D + D) * itemsize),
    )

    return pl.pallas_call(
        partial(_mha_kernel, num_heads),
        out_shape=jax.ShapeDtypeStruct((B, S, D), query.dtype),
        grid_spec=pltpu.PrefetchScalarGridSpec(
            num_scalar_prefetch=0,
            grid=(B, n_q),
            in_specs=[q_spec, kv_spec, kv_spec,
                      w_spec, w_spec, w_spec, w_spec, b_spec],
            out_specs=o_spec,
            scratch_shapes=[pltpu.VMEM((S, D), query.dtype),   # projected K cache
                            pltpu.VMEM((S, D), query.dtype)],  # projected V cache
        ),
        compiler_params=pltpu.CompilerParams(
            # Batch axis parallel (megacore); q axis must be "arbitrary" because
            # the K/V scratch carries state across q-blocks of a batch element.
            dimension_semantics=("parallel", "arbitrary"),
            vmem_limit_bytes=vmem_limit,
        ),
        cost_estimate=cost,
    )(query, key, value, w["wq"], w["wk"], w["wv"], w["wo"], w["bo"])


def _reference_mha(query, key, value, params, num_heads):
    """Plain-JAX reference mirroring the PyTorch module (eval mode, mask=None)."""
    B, S, D = query.shape
    d_k = D // num_heads
    q = query @ params["wq"].T
    k = key @ params["wk"].T
    v = value @ params["wv"].T
    q = q.reshape(B, S, num_heads, d_k).transpose(0, 2, 1, 3)
    k = k.reshape(B, S, num_heads, d_k).transpose(0, 2, 1, 3)
    v = v.reshape(B, S, num_heads, d_k).transpose(0, 2, 1, 3)
    s = jnp.einsum("bhqd,bhkd->bhqk", q, k) / jnp.sqrt(jnp.float32(d_k))
    p = jax.nn.softmax(s, axis=-1)
    ctx = jnp.einsum("bhqk,bhkd->bhqd", p, v)
    ctx = ctx.transpose(0, 2, 1, 3).reshape(B, S, D)
    return ctx @ params["wo"].T + params["bo"]


if __name__ == "__main__":
    # Small shapes consistent with the module: (batch, seq, d_model), h heads.
    B, S, D, H = 2, 8, 32, 4

    root = jax.random.PRNGKey(0)
    kq, kk, kv, kwq, kwk, kwv, kwo, kbo = jax.random.split(root, 8)

    query = jax.random.normal(kq, (B, S, D), dtype=jnp.float32)
    key = jax.random.normal(kk, (B, S, D), dtype=jnp.float32)
    value = jax.random.normal(kv, (B, S, D), dtype=jnp.float32)

    # Deterministic parameter init (shapes match nn.Linear(d_model, d_model)).
    bound = 1.0 / np.sqrt(D)
    params = {
        "wq": jax.random.uniform(kwq, (D, D), jnp.float32, -bound, bound),
        "wk": jax.random.uniform(kwk, (D, D), jnp.float32, -bound, bound),
        "wv": jax.random.uniform(kwv, (D, D), jnp.float32, -bound, bound),
        "wo": jax.random.uniform(kwo, (D, D), jnp.float32, -bound, bound),
        "bo": jax.random.uniform(kbo, (D,), jnp.float32, -bound, bound),
    }

    # Weight layout prep is hoisted out of the per-call path.
    prep = prepare_mha_params(params, num_heads=H, dtype=query.dtype)

    out = multi_head_attention(query, key, value, prep, num_heads=H, prepared=True)
    out = jax.block_until_ready(out)

    ref = _reference_mha(query, key, value, params, num_heads=H)
    # Exact softmax now; tolerance covers MXU f32 (multi-pass) accumulation and
    # the trace-time folding of 1/sqrt(d_k) into the Q weight.
    np.testing.assert_allclose(np.asarray(out), np.asarray(ref), atol=2e-3, rtol=2e-3)

    print("KERNEL_OK")
</pallas_src>

<mosaic_0001>
module attributes {stable_mosaic.version = 11 : i64} {
  func.func @_mha_kernel(%arg0: i32, %arg1: i32, %arg2: memref<1x8x32xf32, #tpu.memory_space<vmem>>, %arg3: memref<1x8x32xf32, #tpu.memory_space<vmem>>, %arg4: memref<1x8x32xf32, #tpu.memory_space<vmem>>, %arg5: memref<32x32xf32, #tpu.memory_space<vmem>>, %arg6: memref<32x32xf32, #tpu.memory_space<vmem>>, %arg7: memref<32x32xf32, #tpu.memory_space<vmem>>, %arg8: memref<32x32xf32, #tpu.memory_space<vmem>>, %arg9: memref<1x32xf32, #tpu.memory_space<vmem>>, %arg10: memref<1x8x32xf32, #tpu.memory_space<vmem>>, %arg11: memref<8x32xf32, #tpu.memory_space<vmem>>, %arg12: memref<8x32xf32, #tpu.memory_space<vmem>>) attributes {dimension_semantics = [#tpu.dimension_semantics<parallel>, #tpu.dimension_semantics<arbitrary>], iteration_bounds = array<i64: 2, 1>, scalar_prefetch = 0 : i64, scratch_operands = 2 : i64, tpu.core_type = #tpu.core_type<tc>, window_params = [{transform_indices = @transform_0, window_bounds = array<i64: 1, 8, 32>}, {transform_indices = @transform_1, window_bounds = array<i64: 1, 8, 32>}, {transform_indices = @transform_2, window_bounds = array<i64: 1, 8, 32>}, {pipeline_mode = #tpu.pipeline_mode<synchronous>, transform_indices = @transform_3, window_bounds = array<i64: 32, 32>}, {pipeline_mode = #tpu.pipeline_mode<synchronous>, transform_indices = @transform_4, window_bounds = array<i64: 32, 32>}, {pipeline_mode = #tpu.pipeline_mode<synchronous>, transform_indices = @transform_5, window_bounds = array<i64: 32, 32>}, {pipeline_mode = #tpu.pipeline_mode<synchronous>, transform_indices = @transform_6, window_bounds = array<i64: 32, 32>}, {pipeline_mode = #tpu.pipeline_mode<synchronous>, transform_indices = @transform_7, window_bounds = array<i64: 1, 32>}, {transform_indices = @transform_8, window_bounds = array<i64: 1, 8, 32>}]} {
    %c0_i32 = arith.constant 0 : i32
    %0 = arith.cmpi eq, %arg1, %c0_i32 : i32
    %1 = arith.extui %0 : i1 to i32
    %c0_i32_0 = arith.constant 0 : i32
    %2 = arith.cmpi ne, %1, %c0_i32_0 : i32
    scf.if %2 {
      %c0_46 = arith.constant 0 : index
      %c0_47 = arith.constant 0 : index
      %c0_48 = arith.constant 0 : index
      %84 = vector.load %arg3[%c0_46, %c0_47, %c0_48] : memref<1x8x32xf32, #tpu.memory_space<vmem>>, vector<1x8x32xf32>
      %85 = vector.shape_cast %84 : vector<1x8x32xf32> to vector<8x32xf32>
      %c0_49 = arith.constant 0 : index
      %c0_50 = arith.constant 0 : index
      %86 = vector.load %arg6[%c0_49, %c0_50] : memref<32x32xf32, #tpu.memory_space<vmem>>, vector<32x32xf32>
      %cst_51 = arith.constant dense<0.000000e+00> : vector<8x32xf32>
      %87 = tpu.matmul %85, %86, %cst_51 {dimension_numbers = #tpu.dot_dimension_numbers<[1], [0], [0], [1], [0, 0, 1, 1], [], []>} : vector<8x32xf32>, vector<32x32xf32>, vector<8x32xf32> -> vector<8x32xf32>
      %c0_52 = arith.constant 0 : index
      %c0_53 = arith.constant 0 : index
      %88 = vector.load %arg11[%c0_52, %c0_53] : memref<8x32xf32, #tpu.memory_space<vmem>>, vector<8x32xf32>
      tpu.vector_store %arg11[%c0_52, %c0_53], %87 {strides = array<i32>} : memref<8x32xf32, #tpu.memory_space<vmem>>, vector<8x32xf32>,
      %c0_54 = arith.constant 0 : index
      %c0_55 = arith.constant 0 : index
      %c0_56 = arith.constant 0 : index
      %89 = vector.load %arg4[%c0_54, %c0_55, %c0_56] : memref<1x8x32xf32, #tpu.memory_space<vmem>>, vector<1x8x32xf32>
      %90 = vector.shape_cast %89 : vector<1x8x32xf32> to vector<8x32xf32>
      %c0_57 = arith.constant 0 : index
      %c0_58 = arith.constant 0 : index
      %91 = vector.load %arg7[%c0_57, %c0_58] : memref<32x32xf32, #tpu.memory_space<vmem>>, vector<32x32xf32>
      %cst_59 = arith.constant dense<0.000000e+00> : vector<8x32xf32>
      %92 = tpu.matmul %90, %91, %cst_59 {dimension_numbers = #tpu.dot_dimension_numbers<[1], [0], [0], [1], [0, 0, 1, 1], [], []>} : vector<8x32xf32>, vector<32x32xf32>, vector<8x32xf32> -> vector<8x32xf32>
      %c0_60 = arith.constant 0 : index
      %c0_61 = arith.constant 0 : index
      %93 = vector.load %arg12[%c0_60, %c0_61] : memref<8x32xf32, #tpu.memory_space<vmem>>, vector<8x32xf32>
      tpu.vector_store %arg12[%c0_60, %c0_61], %92 {strides = array<i32>} : memref<8x32xf32, #tpu.memory_space<vmem>>, vector<8x32xf32>,
    } else {
    }
    %c0 = arith.constant 0 : index
    %c0_1 = arith.constant 0 : index
    %c0_2 = arith.constant 0 : index
    %3 = vector.load %arg2[%c0, %c0_1, %c0_2] : memref<1x8x32xf32, #tpu.memory_space<vmem>>, vector<1x8x32xf32>
    %4 = vector.shape_cast %3 : vector<1x8x32xf32> to vector<8x32xf32>
    %c0_3 = arith.constant 0 : index
    %c0_4 = arith.constant 0 : index
    %5 = vector.load %arg5[%c0_3, %c0_4] : memref<32x32xf32, #tpu.memory_space<vmem>>, vector<32x32xf32>
    %cst = arith.constant dense<0.000000e+00> : vector<8x32xf32>
    %6 = tpu.matmul %4, %5, %cst {dimension_numbers = #tpu.dot_dimension_numbers<[1], [0], [0], [1], [0, 0, 1, 1], [], []>} : vector<8x32xf32>, vector<32x32xf32>, vector<8x32xf32> -> vector<8x32xf32>
    %7 = vector.extract_strided_slice %6 {offsets = [0, 0], sizes = [8, 8], strides = [1, 1]} : vector<8x32xf32> to vector<8x8xf32>
    %c0_5 = arith.constant 0 : index
    %c0_6 = arith.constant 0 : index
    %8 = vector.load %arg11[%c0_5, %c0_6] : memref<8x32xf32, #tpu.memory_space<vmem>>, vector<8x8xf32>
    %c0_7 = arith.constant 0 : index
    %c0_8 = arith.constant 0 : index
    %9 = vector.load %arg12[%c0_7, %c0_8] : memref<8x32xf32, #tpu.memory_space<vmem>>, vector<8x8xf32>
    %10 = tpu.transpose %8, [1, 0] : vector<8x8xf32> -> vector<8x8xf32>
    %cst_9 = arith.constant dense<0.000000e+00> : vector<8x8xf32>
    %11 = tpu.matmul %7, %10, %cst_9 {dimension_numbers = #tpu.dot_dimension_numbers<[1], [0], [0], [1], [0, 0, 1, 1], [], []>} : vector<8x8xf32>, vector<8x8xf32>, vector<8x8xf32> -> vector<8x8xf32>
    %cst_10 = arith.constant dense<0xFF800000> : vector<8xf32>
    %12 = vector.multi_reduction <maximumf>, %11, %cst_10 [1] : vector<8x8xf32> to vector<8xf32>
    %13 = vector.shape_cast %12 : vector<8xf32> to vector<8x1xf32>
    %14 = vector.broadcast %13 : vector<8x1xf32> to vector<8x8xf32>
    %15 = arith.subf %11, %14 : vector<8x8xf32>
    %16 = math.exp %15 : vector<8x8xf32>
    %cst_11 = arith.constant dense<0.000000e+00> : vector<8xf32>
    %17 = vector.multi_reduction <add>, %16, %cst_11 [1] : vector<8x8xf32> to vector<8xf32>
    %18 = vector.shape_cast %17 : vector<8xf32> to vector<8x1xf32>
    %cst_12 = arith.constant 1.000000e+00 : f32
    %19 = vector.broadcast %cst_12 : f32 to vector<8x1xf32>
    %20 = arith.divf %19, %18 : vector<8x1xf32>
    %21 = vector.broadcast %20 : vector<8x1xf32> to vector<8x8xf32>
    %22 = arith.mulf %16, %21 : vector<8x8xf32>
    %cst_13 = arith.constant dense<0.000000e+00> : vector<8x8xf32>
    %23 = tpu.matmul %22, %9, %cst_13 {dimension_numbers = #tpu.dot_dimension_numbers<[1], [0], [0], [1], [0, 0, 1, 1], [], []>} : vector<8x8xf32>, vector<8x8xf32>, vector<8x8xf32> -> vector<8x8xf32>
    %24 = vector.extract_strided_slice %6 {offsets = [0, 8], sizes = [8, 8], strides = [1, 1]} : vector<8x32xf32> to vector<8x8xf32>
    %c0_14 = arith.constant 0 : index
    %c8 = arith.constant 8 : index
    %25 = vector.load %arg11[%c0_14, %c8] : memref<8x32xf32, #tpu.memory_space<vmem>>, vector<8x8xf32>
    %c0_15 = arith.constant 0 : index
    %c8_16 = arith.constant 8 : index
    %26 = vector.load %arg12[%c0_15, %c8_16] : memref<8x32xf32, #tpu.memory_space<vmem>>, vector<8x8xf32>
    %27 = tpu.transpose %25, [1, 0] : vector<8x8xf32> -> vector<8x8xf32>
    %cst_17 = arith.constant dense<0.000000e+00> : vector<8x8xf32>
    %28 = tpu.matmul %24, %27, %cst_17 {dimension_numbers = #tpu.dot_dimension_numbers<[1], [0], [0], [1], [0, 0, 1, 1], [], []>} : vector<8x8xf32>, vector<8x8xf32>, vector<8x8xf32> -> vector<8x8xf32>
    %cst_18 = arith.constant dense<0xFF800000> : vector<8xf32>
    %29 = vector.multi_reduction <maximumf>, %28, %cst_18 [1] : vector<8x8xf32> to vector<8xf32>
    %30 = vector.shape_cast %29 : vector<8xf32> to vector<8x1xf32>
    %31 = vector.broadcast %30 : vector<8x1xf32> to vector<8x8xf32>
    %32 = arith.subf %28, %31 : vector<8x8xf32>
    %33 = math.exp %32 : vector<8x8xf32>
    %cst_19 = arith.constant dense<0.000000e+00> : vector<8xf32>
    %34 = vector.multi_reduction <add>, %33, %cst_19 [1] : vector<8x8xf32> to vector<8xf32>
    %35 = vector.shape_cast %34 : vector<8xf32> to vector<8x1xf32>
    %cst_20 = arith.constant 1.000000e+00 : f32
    %36 = vector.broadcast %cst_20 : f32 to vector<8x1xf32>
    %37 = arith.divf %36, %35 : vector<8x1xf32>
    %38 = vector.broadcast %37 : vector<8x1xf32> to vector<8x8xf32>
    %39 = arith.mulf %33, %38 : vector<8x8xf32>
    %cst_21 = arith.constant dense<0.000000e+00> : vector<8x8xf32>
    %40 = tpu.matmul %39, %26, %cst_21 {dimension_numbers = #tpu.dot_dimension_numbers<[1], [0], [0], [1], [0, 0, 1, 1], [], []>} : vector<8x8xf32>, vector<8x8xf32>, vector<8x8xf32> -> vector<8x8xf32>
    %41 = vector.extract_strided_slice %6 {offsets = [0, 16], sizes = [8, 8], strides = [1, 1]} : vector<8x32xf32> to vector<8x8xf32>
    %c0_22 = arith.constant 0 : index
    %c16 = arith.constant 16 : index
    %42 = vector.load %arg11[%c0_22, %c16] : memref<8x32xf32, #tpu.memory_space<vmem>>, vector<8x8xf32>
    %c0_23 = arith.constant 0 : index
    %c16_24 = arith.constant 16 : index
    %43 = vector.load %arg12[%c0_23, %c16_24] : memref<8x32xf32, #tpu.memory_space<vmem>>, vector<8x8xf32>
    %44 = tpu.transpose %42, [1, 0] : vector<8x8xf32> -> vector<8x8xf32>
    %cst_25 = arith.constant dense<0.000000e+00> : vector<8x8xf32>
    %45 = tpu.matmul %41, %44, %cst_25 {dimension_numbers = #tpu.dot_dimension_numbers<[1], [0], [0], [1], [0, 0, 1, 1], [], []>} : vector<8x8xf32>, vector<8x8xf32>, vector<8x8xf32> -> vector<8x8xf32>
    %cst_26 = arith.constant dense<0xFF800000> : vector<8xf32>
    %46 = vector.multi_reduction <maximumf>, %45, %cst_26 [1] : vector<8x8xf32> to vector<8xf32>
    %47 = vector.shape_cast %46 : vector<8xf32> to vector<8x1xf32>
    %48 = vector.broadcast %47 : vector<8x1xf32> to vector<8x8xf32>
    %49 = arith.subf %45, %48 : vector<8x8xf32>
    %50 = math.exp %49 : vector<8x8xf32>
    %cst_27 = arith.constant dense<0.000000e+00> : vector<8xf32>
    %51 = vector.multi_reduction <add>, %50, %cst_27 [1] : vector<8x8xf32> to vector<8xf32>
    %52 = vector.shape_cast %51 : vector<8xf32> to vector<8x1xf32>
    %cst_28 = arith.constant 1.000000e+00 : f32
    %53 = vector.broadcast %cst_28 : f32 to vector<8x1xf32>
    %54 = arith.divf %53, %52 : vector<8x1xf32>
    %55 = vector.broadcast %54 : vector<8x1xf32> to vector<8x8xf32>
    %56 = arith.mulf %50, %55 : vector<8x8xf32>
    %cst_29 = arith.constant dense<0.000000e+00> : vector<8x8xf32>
    %57 = tpu.matmul %56, %43, %cst_29 {dimension_numbers = #tpu.dot_dimension_numbers<[1], [0], [0], [1], [0, 0, 1, 1], [], []>} : vector<8x8xf32>, vector<8x8xf32>, vector<8x8xf32> -> vector<8x8xf32>
    %58 = vector.extract_strided_slice %6 {offsets = [0, 24], sizes = [8, 8], strides = [1, 1]} : vector<8x32xf32> to vector<8x8xf32>
    %c0_30 = arith.constant 0 : index
    %c24 = arith.constant 24 : index
    %59 = vector.load %arg11[%c0_30, %c24] : memref<8x32xf32, #tpu.memory_space<vmem>>, vector<8x8xf32>
    %c0_31 = arith.constant 0 : index
    %c24_32 = arith.constant 24 : index
    %60 = vector.load %arg12[%c0_31, %c24_32] : memref<8x32xf32, #tpu.memory_space<vmem>>, vector<8x8xf32>
    %61 = tpu.transpose %59, [1, 0] : vector<8x8xf32> -> vector<8x8xf32>
    %cst_33 = arith.constant dense<0.000000e+00> : vector<8x8xf32>
    %62 = tpu.matmul %58, %61, %cst_33 {dimension_numbers = #tpu.dot_dimension_numbers<[1], [0], [0], [1], [0, 0, 1, 1], [], []>} : vector<8x8xf32>, vector<8x8xf32>, vector<8x8xf32> -> vector<8x8xf32>
    %cst_34 = arith.constant dense<0xFF800000> : vector<8xf32>
    %63 = vector.multi_reduction <maximumf>, %62, %cst_34 [1] : vector<8x8xf32> to vector<8xf32>
    %64 = vector.shape_cast %63 : vector<8xf32> to vector<8x1xf32>
    %65 = vector.broadcast %64 : vector<8x1xf32> to vector<8x8xf32>
    %66 = arith.subf %62, %65 : vector<8x8xf32>
    %67 = math.exp %66 : vector<8x8xf32>
    %cst_35 = arith.constant dense<0.000000e+00> : vector<8xf32>
    %68 = vector.multi_reduction <add>, %67, %cst_35 [1] : vector<8x8xf32> to vector<8xf32>
    %69 = vector.shape_cast %68 : vector<8xf32> to vector<8x1xf32>
    %cst_36 = arith.constant 1.000000e+00 : f32
    %70 = vector.broadcast %cst_36 : f32 to vector<8x1xf32>
    %71 = arith.divf %70, %69 : vector<8x1xf32>
    %72 = vector.broadcast %71 : vector<8x1xf32> to vector<8x8xf32>
    %73 = arith.mulf %67, %72 : vector<8x8xf32>
    %cst_37 = arith.constant dense<0.000000e+00> : vector<8x8xf32>
    %74 = tpu.matmul %73, %60, %cst_37 {dimension_numbers = #tpu.dot_dimension_numbers<[1], [0], [0], [1], [0, 0, 1, 1], [], []>} : vector<8x8xf32>, vector<8x8xf32>, vector<8x8xf32> -> vector<8x8xf32>
    %75 = tpu.concatenate %23, %40, %57, %74 in 1 : vector<8x8xf32>, vector<8x8xf32>, vector<8x8xf32>, vector<8x8xf32> -> vector<8x32xf32>
    %c0_38 = arith.constant 0 : index
    %c0_39 = arith.constant 0 : index
    %76 = vector.load %arg8[%c0_38, %c0_39] : memref<32x32xf32, #tpu.memory_space<vmem>>, vector<32x32xf32>
    %cst_40 = arith.constant dense<0.000000e+00> : vector<8x32xf32>
    %77 = tpu.matmul %75, %76, %cst_40 {dimension_numbers = #tpu.dot_dimension_numbers<[1], [0], [0], [1], [0, 0, 1, 1], [], []>} : vector<8x32xf32>, vector<32x32xf32>, vector<8x32xf32> -> vector<8x32xf32>
    %c0_41 = arith.constant 0 : index
    %c0_42 = arith.constant 0 : index
    %78 = vector.load %arg9[%c0_41, %c0_42] : memref<1x32xf32, #tpu.memory_space<vmem>>, vector<1x32xf32>
    %79 = vector.broadcast %78 : vector<1x32xf32> to vector<8x32xf32>
    %80 = arith.addf %77, %79 : vector<8x32xf32>
    %c0_43 = arith.constant 0 : index
    %c0_44 = arith.constant 0 : index
    %c0_45 = arith.constant 0 : index
    %81 = vector.load %arg10[%c0_43, %c0_44, %c0_45] : memref<1x8x32xf32, #tpu.memory_space<vmem>>, vector<1x8x32xf32>
    %82 = vector.shape_cast %81 : vector<1x8x32xf32> to vector<8x32xf32>
    %83 = vector.shape_cast %80 : vector<8x32xf32> to vector<1x8x32xf32>
    tpu.vector_store %arg10[%c0_43, %c0_44, %c0_45], %83 {strides = array<i32>} : memref<1x8x32xf32, #tpu.memory_space<vmem>>, vector<1x8x32xf32>,
    return
  }
  func.func @transform_0(%arg0: i32, %arg1: i32) -> (i32, i32, i32) {
    %c0_i32 = arith.constant 0 : i32
    %c0_i32_0 = arith.constant 0 : i32
    return %arg0, %arg1, %c0_i32 : i32, i32, i32
  }
  func.func @transform_1(%arg0: i32, %arg1: i32) -> (i32, i32, i32) {
    %c0_i32 = arith.constant 0 : i32
    %c0_i32_0 = arith.constant 0 : i32
    %c0_i32_1 = arith.constant 0 : i32
    return %arg0, %c0_i32, %c0_i32_0 : i32, i32, i32
  }
  func.func @transform_2(%arg0: i32, %arg1: i32) -> (i32, i32, i32) {
    %c0_i32 = arith.constant 0 : i32
    %c0_i32_0 = arith.constant 0 : i32
    %c0_i32_1 = arith.constant 0 : i32
    return %arg0, %c0_i32, %c0_i32_0 : i32, i32, i32
  }
  func.func @transform_3(%arg0: i32, %arg1: i32) -> (i32, i32) {
    %c0_i32 = arith.constant 0 : i32
    %c0_i32_0 = arith.constant 0 : i32
    %c0_i32_1 = arith.constant 0 : i32
    return %c0_i32, %c0_i32_0 : i32, i32
  }
  func.func @transform_4(%arg0: i32, %arg1: i32) -> (i32, i32) {
    %c0_i32 = arith.constant 0 : i32
    %c0_i32_0 = arith.constant 0 : i32
    %c0_i32_1 = arith.constant 0 : i32
    return %c0_i32, %c0_i32_0 : i32, i32
  }
  func.func @transform_5(%arg0: i32, %arg1: i32) -> (i32, i32) {
    %c0_i32 = arith.constant 0 : i32
    %c0_i32_0 = arith.constant 0 : i32
    %c0_i32_1 = arith.constant 0 : i32
    return %c0_i32, %c0_i32_0 : i32, i32
  }
  func.func @transform_6(%arg0: i32, %arg1: i32) -> (i32, i32) {
    %c0_i32 = arith.constant 0 : i32
    %c0_i32_0 = arith.constant 0 : i32
    %c0_i32_1 = arith.constant 0 : i32
    return %c0_i32, %c0_i32_0 : i32, i32
  }
  func.func @transform_7(%arg0: i32, %arg1: i32) -> (i32, i32) {
    %c0_i32 = arith.constant 0 : i32
    %c0_i32_0 = arith.constant 0 : i32
    %c0_i32_1 = arith.constant 0 : i32
    return %c0_i32, %c0_i32_0 : i32, i32
  }
  func.func @transform_8(%arg0: i32, %arg1: i32) -> (i32, i32, i32) {
    %c0_i32 = arith.constant 0 : i32
    %c0_i32_0 = arith.constant 0 : i32
    return %arg0, %arg1, %c0_i32 : i32, i32, i32
  }
}

</mosaic_0001>

<llo_original>
// kernel: tpu_custom_call.1
$region0: #{tpu_custom_call.1}
  #allocation0 [shape = 'u32[]', space=smem, size = 0x4, offset = 0x4, fixed_abs, tag = 'smem constant byte address 0x4 - core index']
  #allocation1 [shape = 'u32[144,128]{1,0:T(1,128)}', space=vmem, size = 0x12000, scoped, tag = 'internal scratch']
  #allocation2 [shape = 'f32[8,32]{1,0:T(8,128)}', space=vmem, size = 0x1000, scoped, tag = 'scratch operand']
  #allocation3 [shape = 'f32[8,32]{1,0:T(8,128)}', space=vmem, size = 0x1000, scoped, tag = 'scratch operand']
  %s0 = inlined_call_operand.hbm [shape: f32[2,8,32], index: 0, kind: input, shape index: {}]
  %s1 = inlined_call_operand.hbm [shape: f32[2,8,32], index: 1, kind: input, shape index: {}]
  %s2 = inlined_call_operand.hbm [shape: f32[2,8,32], index: 2, kind: input, shape index: {}]
  %s3 = inlined_call_operand.hbm [shape: f32[32,32], index: 3, kind: input, shape index: {}]
  %s4 = inlined_call_operand.hbm [shape: f32[32,32], index: 4, kind: input, shape index: {}]
  %s5 = inlined_call_operand.hbm [shape: f32[32,32], index: 5, kind: input, shape index: {}]
  %s6 = inlined_call_operand.hbm [shape: f32[32,32], index: 6, kind: input, shape index: {}]
  %s7 = inlined_call_operand.vmem [shape: f32[1,32], index: 7, kind: input, shape index: {}]
  %s8 = inlined_call_operand.hbm [shape: f32[2,8,32], index: 8, kind: output, shape index: {}]
  %s9 = sld [smem:[#allocation0]]
  $region97: #{tpu_custom_call.1} parent=0
    _
  %s11 = ssub.s32 1, %s9
  %s12 = scalar_select 0, %s11, %s9
  $region1: #{tpu_custom_call.1} parent=0
    #allocation4 [shape = 'u8[8192]{0}', space=vmem, size = 0x2000, scoped, tag = 'input window, operand 0']
    #allocation5 [shape = 's32[2]{0}', space=sflag, size = 0x8, scoped, tag = 'scoped memory for tpu_custom_call.1']
    #allocation6 [shape = 's32[2]{0}', space=sflag, size = 0x8, scoped, tag = 'scoped memory for tpu_custom_call.1']
    #allocation7 [shape = 'u8[8192]{0}', space=vmem, size = 0x2000, scoped, tag = 'input window, operand 1']
    #allocation8 [shape = 's32[2]{0}', space=sflag, size = 0x8, scoped, tag = 'scoped memory for tpu_custom_call.1']
    #allocation9 [shape = 'u8[8192]{0}', space=vmem, size = 0x2000, scoped, tag = 'input window, operand 2']
    #allocation10 [shape = 'u8[16384]{0}', space=vmem, size = 0x4000, scoped, tag = 'input window, operand 3, single buffered']
    #allocation11 [shape = 's32[1]{0}', space=sflag, size = 0x4, scoped, tag = 'scoped memory for tpu_custom_call.1']
    #allocation12 [shape = 'u8[16384]{0}', space=vmem, size = 0x4000, scoped, tag = 'input window, operand 4, single buffered']
    #allocation13 [shape = 'u8[16384]{0}', space=vmem, size = 0x4000, scoped, tag = 'input window, operand 5, single buffered']
    #allocation14 [shape = 's32[1]{0}', space=sflag, size = 0x4, scoped, tag = 'scoped memory for tpu_custom_call.1']
    #allocation15 [shape = 'u8[16384]{0}', space=vmem, size = 0x4000, scoped, tag = 'input window, operand 6, single buffered']
    #allocation16 [shape = 'u8[8192]{0}', space=vmem, size = 0x2000, scoped, tag = 'output window, operand 0']
    %13 = vsyncpa [#allocation5], 0
    %s14 = scalar_lea.sflag [#allocation5], 1
    %15 = vsyncpa %s14, 0
    %16 = vsyncpa [#allocation8], 0
    %s17 = scalar_lea.sflag [#allocation8], 1
    %18 = vsyncpa %s17, 0
    %19 = vsyncpa [#allocation11], 0
    %20 = vsyncpa [#allocation14], 0
    %21 = vsyncpa [#allocation6], 0
    %s22 = scalar_lea.sflag [#allocation6], 1
    %23 = vsyncpa %s22, 0
    loop: start=0, step=1, limit=4
    $region2: #{tpu_custom_call.1} parent=1 // loop_pre_header
      _
    $region3: #{tpu_custom_call.1} parent=1 // loop_header
      %s25 = sphi 0, %s29
      %p26 = scmp.ge.s32.totalorder %s25, 4
      %s32 = sphi 0, %s44
      %s33 = sphi 0, %s40
      %s34 = sphi 0, %s32
      %s35 = sphi 0, %s33
      %s36 = sphi 0, %s34
      %s37 = sphi 0, %s35
      %s49 = sphi 0, %s51
      %s52 = sphi 0, %s49
      %s53 = sphi 0, %s52
      %s69 = sphi 0, %s53
      %s75 = sphi 0, %s77
      %s78 = sphi 0, %s75
      %s79 = sphi 0, %s78
      %s95 = sphi 0, %s79
      %s101 = sphi 0, %s103
      %s104 = sphi 0, %s101
      %s105 = sphi 0, %s104
      %s121 = sphi 0, %s105
      %s125 = sphi 0, %s125
      %s127 = sphi 0, %s125
      %s128 = sphi 0, %s127
      %s142 = sphi 0, %s128
      %s146 = sphi 0, %s146
      %s148 = sphi 0, %s146
      %s149 = sphi 0, %s148
      %s163 = sphi 0, %s149
      %s167 = sphi 0, %s167
      %s169 = sphi 0, %s167
      %s170 = sphi 0, %s169
      %s184 = sphi 0, %s170
      %s188 = sphi 0, %s188
      %s190 = sphi 0, %s188
      %s191 = sphi 0, %s190
      %s205 = sphi 0, %s191
      %s209 = sphi 0, %s209
      %s211 = sphi 0, %s209
      %s212 = sphi 0, %s211
      %s226 = sphi 0, %s212
      %s234 = sphi 0, %s236
      %s237 = sphi 0, %s234
      %s238 = sphi 0, %s237
      %s254 = sphi 0, %s238
    $region4: #{tpu_custom_call.1} parent=1 // loop_header_branch
      %28 = sbr.rel (%p26) target = $region8
    $region5: #{tpu_custom_call.1} parent=1 // loop_body
      %s30 = ssub.s32 %s25, 1
      %s31 = ssub.s32 %s25, 2
      %s38 = sadd.s32 1, %s33
      %p39 = scmp.ge.s32.totalorder %s38, 1
      %s40 = scalar_select %p39, 0, %s38
      %s41 = sadd.s32 1, %s32
      %s42 = scalar_select %p39, %s41, %s32
      %p43 = scmp.ge.s32.totalorder %s42, 2
      %s44 = scalar_select %p43, 0, %s42
      %s45 = ssub.s32 %s32, %s44
      %s46 = ssub.s32 %s33, %s40
      %s47 = sor.u32 %s45, %s46
      %p48 = scmp.eq.s32.totalorder %s47, 0
      %s50 = sadd.s32 %s49, 1
      %s51 = scalar_select %p48, %s49, %s50
      %p54 = pneg %p48
      %p55 = scmp.eq.s32.totalorder %s25, 1
      %p56 = por %p54, %p55
      %p57 = scmp.ne.s32.totalorder %s49, %s52
      %p58 = scmp.eq.s32.totalorder %s25, 0
      %p59 = por %p57, %p58
      %p60 = scmp.ne.s32.totalorder %s49, %s52
      %p61 = scmp.eq.s32.totalorder %s30, 1
      %p62 = por %p60, %p61
      %p63 = scmp.ne.s32.totalorder %s52, %s53
      %p64 = scmp.eq.s32.totalorder %s30, 0
      %p65 = por %p63, %p64
      %p66 = scmp.ne.s32.totalorder %s52, %s53
      %p67 = scmp.eq.s32.totalorder %s31, 1
      %p68 = por %p66, %p67
      %p70 = scmp.ne.s32.totalorder %s53, %s69
      %p71 = scmp.eq.s32.totalorder %s31, 0
      %p72 = por %p70, %p71
      %s73 = ssub.s32 %s32, %s44
      %p74 = scmp.eq.s32.totalorder %s73, 0
      %s76 = sadd.s32 %s75, 1
      %s77 = scalar_select %p74, %s75, %s76
      %p80 = pneg %p74
      %p81 = scmp.eq.s32.totalorder %s25, 1
      %p82 = por %p80, %p81
      %p83 = scmp.ne.s32.totalorder %s75, %s78
      %p84 = scmp.eq.s32.totalorder %s25, 0
      %p85 = por %p83, %p84
      %p86 = scmp.ne.s32.totalorder %s75, %s78
      %p87 = scmp.eq.s32.totalorder %s30, 1
      %p88 = por %p86, %p87
      %p89 = scmp.ne.s32.totalorder %s78, %s79
      %p90 = scmp.eq.s32.totalorder %s30, 0
      %p91 = por %p89, %p90
      %p92 = scmp.ne.s32.totalorder %s78, %s79
      %p93 = scmp.eq.s32.totalorder %s31, 1
      %p94 = por %p92, %p93
      %p96 = scmp.ne.s32.totalorder %s79, %s95
      %p97 = scmp.eq.s32.totalorder %s31, 0
      %p98 = por %p96, %p97
      %s99 = ssub.s32 %s32, %s44
      %p100 = scmp.eq.s32.totalorder %s99, 0
      %s102 = sadd.s32 %s101, 1
      %s103 = scalar_select %p100, %s101, %s102
      %p106 = pneg %p100
      %p107 = scmp.eq.s32.totalorder %s25, 1
      %p108 = por %p106, %p107
      %p109 = scmp.ne.s32.totalorder %s101, %s104
      %p110 = scmp.eq.s32.totalorder %s25, 0
      %p111 = por %p109, %p110
      %p112 = scmp.ne.s32.totalorder %s101, %s104
      %p113 = scmp.eq.s32.totalorder %s30, 1
      %p114 = por %p112, %p113
      %p115 = scmp.ne.s32.totalorder %s104, %s105
      %p116 = scmp.eq.s32.totalorder %s30, 0
      %p117 = por %p115, %p116
      %p118 = scmp.ne.s32.totalorder %s104, %s105
      %p119 = scmp.eq.s32.totalorder %s31, 1
      %p120 = por %p118, %p119
      %p122 = scmp.ne.s32.totalorder %s105, %s121
      %p123 = scmp.eq.s32.totalorder %s31, 0
      %p124 = por %p122, %p123
      %s126 = sadd.s32 %s125, 1
      %p129 = scmp.eq.s32.totalorder %s25, 1
      %p130 = scmp.ne.s32.totalorder %s125, %s127
      %p131 = scmp.eq.s32.totalorder %s25, 0
      %p132 = por %p130, %p131
      %p133 = scmp.ne.s32.totalorder %s125, %s127
      %p134 = scmp.eq.s32.totalorder %s30, 1
      %p135 = por %p133, %p134
      %p136 = scmp.ne.s32.totalorder %s127, %s128
      %p137 = scmp.eq.s32.totalorder %s30, 0
      %p138 = por %p136, %p137
      %p139 = scmp.ne.s32.totalorder %s127, %s128
      %p140 = scmp.eq.s32.totalorder %s31, 1
      %p141 = por %p139, %p140
      %p143 = scmp.ne.s32.totalorder %s128, %s142
      %p144 = scmp.eq.s32.totalorder %s31, 0
      %p145 = por %p143, %p144
      %s147 = sadd.s32 %s146, 1
      %p150 = scmp.eq.s32.totalorder %s25, 1
      %p151 = scmp.ne.s32.totalorder %s146, %s148
      %p152 = scmp.eq.s32.totalorder %s25, 0
      %p153 = por %p151, %p152
      %p154 = scmp.ne.s32.totalorder %s146, %s148
      %p155 = scmp.eq.s32.totalorder %s30, 1
      %p156 = por %p154, %p155
      %p157 = scmp.ne.s32.totalorder %s148, %s149
      %p158 = scmp.eq.s32.totalorder %s30, 0
      %p159 = por %p157, %p158
      %p160 = scmp.ne.s32.totalorder %s148, %s149
      %p161 = scmp.eq.s32.totalorder %s31, 1
      %p162 = por %p160, %p161
      %p164 = scmp.ne.s32.totalorder %s149, %s163
      %p165 = scmp.eq.s32.totalorder %s31, 0
      %p166 = por %p164, %p165
      %s168 = sadd.s32 %s167, 1
      %p171 = scmp.eq.s32.totalorder %s25, 1
      %p172 = scmp.ne.s32.totalorder %s167, %s169
      %p173 = scmp.eq.s32.totalorder %s25, 0
      %p174 = por %p172, %p173
      %p175 = scmp.ne.s32.totalorder %s167, %s169
      %p176 = scmp.eq.s32.totalorder %s30, 1
      %p177 = por %p175, %p176
      %p178 = scmp.ne.s32.totalorder %s169, %s170
      %p179 = scmp.eq.s32.totalorder %s30, 0
      %p180 = por %p178, %p179
      %p181 = scmp.ne.s32.totalorder %s169, %s170
      %p182 = scmp.eq.s32.totalorder %s31, 1
      %p183 = por %p181, %p182
      %p185 = scmp.ne.s32.totalorder %s170, %s184
      %p186 = scmp.eq.s32.totalorder %s31, 0
      %p187 = por %p185, %p186
      %s189 = sadd.s32 %s188, 1
      %p192 = scmp.eq.s32.totalorder %s25, 1
      %p193 = scmp.ne.s32.totalorder %s188, %s190
      %p194 = scmp.eq.s32.totalorder %s25, 0
      %p195 = por %p193, %p194
      %p196 = scmp.ne.s32.totalorder %s188, %s190
      %p197 = scmp.eq.s32.totalorder %s30, 1
      %p198 = por %p196, %p197
      %p199 = scmp.ne.s32.totalorder %s190, %s191
      %p200 = scmp.eq.s32.totalorder %s30, 0
      %p201 = por %p199, %p200
      %p202 = scmp.ne.s32.totalorder %s190, %s191
      %p203 = scmp.eq.s32.totalorder %s31, 1
      %p204 = por %p202, %p203
      %p206 = scmp.ne.s32.totalorder %s191, %s205
      %p207 = scmp.eq.s32.totalorder %s31, 0
      %p208 = por %p206, %p207
      %s210 = sadd.s32 %s209, 1
      %p213 = scmp.eq.s32.totalorder %s25, 1
      %p214 = scmp.ne.s32.totalorder %s209, %s211
      %p215 = scmp.eq.s32.totalorder %s25, 0
      %p216 = por %p214, %p215
      %p217 = scmp.ne.s32.totalorder %s209, %s211
      %p218 = scmp.eq.s32.totalorder %s30, 1
      %p219 = por %p217, %p218
      %p220 = scmp.ne.s32.totalorder %s211, %s212
      %p221 = scmp.eq.s32.totalorder %s30, 0
      %p222 = por %p220, %p221
      %p223 = scmp.ne.s32.totalorder %s211, %s212
      %p224 = scmp.eq.s32.totalorder %s31, 1
      %p225 = por %p223, %p224
      %p227 = scmp.ne.s32.totalorder %s212, %s226
      %p228 = scmp.eq.s32.totalorder %s31, 0
      %p229 = por %p227, %p228
      %s230 = ssub.s32 %s32, %s44
      %s231 = ssub.s32 %s33, %s40
      %s232 = sor.u32 %s230, %s231
      %p233 = scmp.eq.s32.totalorder %s232, 0
      %s235 = sadd.s32 %s234, 1
      %s236 = scalar_select %p233, %s234, %s235
      %p239 = pneg %p233
      %p240 = scmp.eq.s32.totalorder %s25, 1
      %p241 = por %p239, %p240
      %p242 = scmp.ne.s32.totalorder %s234, %s237
      %p243 = scmp.eq.s32.totalorder %s25, 0
      %p244 = por %p242, %p243
      %p245 = scmp.ne.s32.totalorder %s234, %s237
      %p246 = scmp.eq.s32.totalorder %s30, 1
      %p247 = por %p245, %p246
      %p248 = scmp.ne.s32.totalorder %s237, %s238
      %p249 = scmp.eq.s32.totalorder %s30, 0
      %p250 = por %p248, %p249
      %p251 = scmp.ne.s32.totalorder %s237, %s238
      %p252 = scmp.eq.s32.totalorder %s31, 1
      %p253 = por %p251, %p252
      %p255 = scmp.ne.s32.totalorder %s238, %s254
      %p256 = scmp.eq.s32.totalorder %s31, 0
      %p257 = por %p255, %p256
      %p258 = scmp.le.s32.totalorder 1, %s25
      %p259 = scmp.lt.s32.totalorder %s25, 3
      %p260 = pnand %p258, %p259
      %p261 = pneg %p260
      // Predicated region
      $region9: #{tpu_custom_call.1} parent=5 // pred_check
        _
      $region10: #{tpu_custom_call.1} parent=5 // pred_check_branch
        %263 = sbr.rel (%p260) target = $region12
      $region11: #{tpu_custom_call.1} parent=5 // pred_region
        %s264 = ssub.s32 %s25, 1
        // Predicated region
        $region13: #{tpu_custom_call.1} parent=11 // pred_check
          %p265 = pneg %p138
        $region14: #{tpu_custom_call.1} parent=11 // pred_check_branch
          %267 = sbr.rel (%p265) target = $region16
        $region15: #{tpu_custom_call.1} parent=11 // pred_region
          %s269 = ssub.s32 512, 512
          %270 = vsyncadd [#allocation11], %s269
          %s271 = sshll.u32 [#allocation10], 4
          %s272 = int_to_ptr.vmem [resolvable:$true] %s271
          %277 = dma.hbm_to_vmem [thread:$0]  %s3, 512, %s272, [#allocation11], 128, 128, 8
        $region16: #{tpu_custom_call.1} parent=11 // pred_fallthru
          _
        // Predicated region
        $region17: #{tpu_custom_call.1} parent=11 // pred_check
          %p278 = pneg %p159
        $region18: #{tpu_custom_call.1} parent=11 // pred_check_branch
          %280 = sbr.rel (%p278) target = $region20
        $region19: #{tpu_custom_call.1} parent=11 // pred_region
          %s282 = ssub.s32 512, 512
          %283 = vsyncadd [#allocation11], %s282
          %s284 = sshll.u32 [#allocation12], 4
          %s285 = int_to_ptr.vmem [resolvable:$true] %s284
          %290 = dma.hbm_to_vmem [thread:$0]  %s4, 512, %s285, [#allocation11], 128, 128, 8
        $region20: #{tpu_custom_call.1} parent=11 // pred_fallthru
          _
        // Predicated region
        $region21: #{tpu_custom_call.1} parent=11 // pred_check
          %p291 = pneg %p180
        $region22: #{tpu_custom_call.1} parent=11 // pred_check_branch
          %293 = sbr.rel (%p291) target = $region24
        $region23: #{tpu_custom_call.1} parent=11 // pred_region
          %s295 = ssub.s32 512, 512
          %296 = vsyncadd [#allocation14], %s295
          %s297 = sshll.u32 [#allocation13], 4
          %s298 = int_to_ptr.vmem [resolvable:$true] %s297
          %303 = dma.hbm_to_vmem [thread:$0]  %s5, 512, %s298, [#allocation14], 128, 128, 8
        $region24: #{tpu_custom_call.1} parent=11 // pred_fallthru
          _
        // Predicated region
        $region25: #{tpu_custom_call.1} parent=11 // pred_check
          %p304 = pneg %p201
        $region26: #{tpu_custom_call.1} parent=11 // pred_check_branch
          %306 = sbr.rel (%p304) target = $region28
        $region27: #{tpu_custom_call.1} parent=11 // pred_region
          %s308 = ssub.s32 512, 512
          %309 = vsyncadd [#allocation14], %s308
          %s310 = sshll.u32 [#allocation15], 4
          %s311 = int_to_ptr.vmem [resolvable:$true] %s310
          %316 = dma.hbm_to_vmem [thread:$0]  %s6, 512, %s311, [#allocation14], 128, 128, 8
        $region28: #{tpu_custom_call.1} parent=11 // pred_fallthru
          _
        // Predicated region
        $region29: #{tpu_custom_call.1} parent=11 // pred_check
          %p317 = pneg %p222
        $region30: #{tpu_custom_call.1} parent=11 // pred_check_branch
          %319 = sbr.rel (%p317) target = $region32
        $region31: #{tpu_custom_call.1} parent=11 // pred_region
          _
        $region32: #{tpu_custom_call.1} parent=11 // pred_fallthru
          _
      $region12: #{tpu_custom_call.1} parent=5 // pred_fallthru
        _
      %p320 = scmp.lt.s32.totalorder %s25, 2
      // Predicated region
      $region33: #{tpu_custom_call.1} parent=5 // pred_check
        %p321 = pneg %p320
      $region34: #{tpu_custom_call.1} parent=5 // pred_check_branch
        %323 = sbr.rel (%p321) target = $region36
      $region35: #{tpu_custom_call.1} parent=5 // pred_region
        // Predicated region
        $region37: #{tpu_custom_call.1} parent=35 // pred_check
          %p324 = pneg %p59
        $region38: #{tpu_custom_call.1} parent=35 // pred_check_branch
          %326 = sbr.rel (%p324) target = $region40
        $region39: #{tpu_custom_call.1} parent=35 // pred_region
          %s327 = sand.u32 %s49, 1
          %s328 = scalar_lea.sflag [#allocation5], %s327
          %s329 = sand.u32 %s49, 1
          %s330 = smul.addr %s329, 8
          %s331 = scalar_lea.vmem [#allocation4], %s330
          %s333 = ssub.s32 128, 128
          %334 = vsyncadd %s328, %s333
          %s335 = sadd.s32 %s33, %s32
          %s336 = smul.addr %s335, 128
          %s337 = scalar_lea.hbm %s0, %s336
          %s339 = sshll.u32 %s331, 4
          %s340 = int_to_ptr.vmem [resolvable:$true] %s339
          %342 = dma.hbm_to_vmem [thread:$0]  %s337, 128, %s340, %s328
        $region40: #{tpu_custom_call.1} parent=35 // pred_fallthru
          _
        // Predicated region
        $region41: #{tpu_custom_call.1} parent=35 // pred_check
          %p343 = pneg %p85
        $region42: #{tpu_custom_call.1} parent=35 // pred_check_branch
          %345 = sbr.rel (%p343) target = $region44
        $region43: #{tpu_custom_call.1} parent=35 // pred_region
          %s346 = sand.u32 %s25, 1
          %s347 = scalar_lea.sflag [#allocation8], %s346
          %s348 = sand.u32 %s75, 1
          %s349 = smul.addr %s348, 8
          %s350 = scalar_lea.vmem [#allocation7], %s349
          %s352 = ssub.s32 128, 128
          %353 = vsyncadd %s347, %s352
          %s354 = smul.addr %s32, 128
          %s355 = scalar_lea.hbm %s1, %s354
          %s357 = sshll.u32 %s350, 4
          %s358 = int_to_ptr.vmem [resolvable:$true] %s357
          %360 = dma.hbm_to_vmem [thread:$0]  %s355, 128, %s358, %s347
        $region44: #{tpu_custom_call.1} parent=35 // pred_fallthru
          _
        // Predicated region
        $region45: #{tpu_custom_call.1} parent=35 // pred_check
          %p361 = pneg %p111
        $region46: #{tpu_custom_call.1} parent=35 // pred_check_branch
          %363 = sbr.rel (%p361) target = $region48
        $region47: #{tpu_custom_call.1} parent=35 // pred_region
          %s364 = sand.u32 %s25, 1
          %s365 = scalar_lea.sflag [#allocation8], %s364
          %s366 = sand.u32 %s101, 1
          %s367 = smul.addr %s366, 8
          %s368 = scalar_lea.vmem [#allocation9], %s367
          %s370 = ssub.s32 128, 128
          %371 = vsyncadd %s365, %s370
          %s372 = smul.addr %s32, 128
          %s373 = scalar_lea.hbm %s2, %s372
          %s375 = sshll.u32 %s368, 4
          %s376 = int_to_ptr.vmem [resolvable:$true] %s375
          %378 = dma.hbm_to_vmem [thread:$0]  %s373, 128, %s376, %s365
        $region48: #{tpu_custom_call.1} parent=35 // pred_fallthru
          _
      $region36: #{tpu_custom_call.1} parent=5 // pred_fallthru
        _
      %p379 = scmp.le.s32.totalorder 1, %s25
      %p380 = scmp.lt.s32.totalorder %s25, 3
      %p381 = pnand %p379, %p380
      %p382 = pneg %p381
      // Predicated region
      $region49: #{tpu_custom_call.1} parent=5 // pred_check
        _
      $region50: #{tpu_custom_call.1} parent=5 // pred_check_branch
        %384 = sbr.rel (%p381) target = $region52
      $region51: #{tpu_custom_call.1} parent=5 // pred_region
        %s385 = ssub.s32 %s25, 1
        %s386 = sand.u32 %s52, 1
        %s387 = scalar_lea.sflag [#allocation5], %s386
        %s388 = sand.u32 %s52, 1
        %s389 = smul.addr %s388, 8
        %s390 = scalar_lea.vmem [#allocation4], %s389
        // Predicated region
        $region53: #{tpu_custom_call.1} parent=51 // pred_check
          %p391 = pneg %p65
        $region54: #{tpu_custom_call.1} parent=51 // pred_check_branch
          %393 = sbr.rel (%p391) target = $region56
        $region55: #{tpu_custom_call.1} parent=51 // pred_region
          %394 = dma.done %s387, 128
        $region56: #{tpu_custom_call.1} parent=51 // pred_fallthru
          _
        %s395 = sand.u32 %s30, 1
        %s396 = scalar_lea.sflag [#allocation8], %s395
        %s397 = sand.u32 %s78, 1
        %s398 = smul.addr %s397, 8
        %s399 = scalar_lea.vmem [#allocation7], %s398
        // Predicated region
        $region57: #{tpu_custom_call.1} parent=51 // pred_check
          %p400 = pneg %p91
        $region58: #{tpu_custom_call.1} parent=51 // pred_check_branch
          %402 = sbr.rel (%p400) target = $region60
        $region59: #{tpu_custom_call.1} parent=51 // pred_region
          %403 = dma.done %s396, 128
        $region60: #{tpu_custom_call.1} parent=51 // pred_fallthru
          _
        %s404 = sand.u32 %s30, 1
        %s405 = scalar_lea.sflag [#allocation8], %s404
        %s406 = sand.u32 %s104, 1
        %s407 = smul.addr %s406, 8
        %s408 = scalar_lea.vmem [#allocation9], %s407
        // Predicated region
        $region61: #{tpu_custom_call.1} parent=51 // pred_check
          %p409 = pneg %p117
        $region62: #{tpu_custom_call.1} parent=51 // pred_check_branch
          %411 = sbr.rel (%p409) target = $region64
        $region63: #{tpu_custom_call.1} parent=51 // pred_region
          %412 = dma.done %s405, 128
        $region64: #{tpu_custom_call.1} parent=51 // pred_fallthru
          _
        // Predicated region
        $region65: #{tpu_custom_call.1} parent=51 // pred_check
          %p413 = pneg %p138
        $region66: #{tpu_custom_call.1} parent=51 // pred_check_branch
          %415 = sbr.rel (%p413) target = $region68
        $region67: #{tpu_custom_call.1} parent=51 // pred_region
          %416 = dma.done [#allocation11], 512
        $region68: #{tpu_custom_call.1} parent=51 // pred_fallthru
          _
        // Predicated region
        $region69: #{tpu_custom_call.1} parent=51 // pred_check
          %p417 = pneg %p159
        $region70: #{tpu_custom_call.1} parent=51 // pred_check_branch
          %419 = sbr.rel (%p417) target = $region72
        $region71: #{tpu_custom_call.1} parent=51 // pred_region
          %420 = dma.done [#allocation11], 512
        $region72: #{tpu_custom_call.1} parent=51 // pred_fallthru
          _
        // Predicated region
        $region73: #{tpu_custom_call.1} parent=51 // pred_check
          %p421 = pneg %p180
        $region74: #{tpu_custom_call.1} parent=51 // pred_check_branch
          %423 = sbr.rel (%p421) target = $region76
        $region75: #{tpu_custom_call.1} parent=51 // pred_region
          %424 = dma.done [#allocation14], 512
        $region76: #{tpu_custom_call.1} parent=51 // pred_fallthru
          _
        // Predicated region
        $region77: #{tpu_custom_call.1} parent=51 // pred_check
          %p425 = pneg %p201
        $region78: #{tpu_custom_call.1} parent=51 // pred_check_branch
          %427 = sbr.rel (%p425) target = $region80
        $region79: #{tpu_custom_call.1} parent=51 // pred_region
          %428 = dma.done [#allocation14], 512
        $region80: #{tpu_custom_call.1} parent=51 // pred_fallthru
          _
        %s429 = sand.u32 %s52, 1
        %s430 = scalar_lea.sflag [#allocation5], %s429
        %s431 = sand.u32 %s52, 1
        %s432 = smul.addr %s431, 8
        %s433 = scalar_lea.vmem [#allocation4], %s432
        %p434 = pneg %p65
        %p435 = pneg %p62
        %s436 = sand.u32 %s30, 1
        %s437 = scalar_lea.sflag [#allocation8], %s436
        %s438 = sand.u32 %s78, 1
        %s439 = smul.addr %s438, 8
        %s440 = scalar_lea.vmem [#allocation7], %s439
        %p441 = pneg %p91
        %p442 = pneg %p88
        %s443 = sand.u32 %s30, 1
        %s444 = scalar_lea.sflag [#allocation8], %s443
        %s445 = sand.u32 %s104, 1
        %s446 = smul.addr %s445, 8
        %s447 = scalar_lea.vmem [#allocation9], %s446
        %p448 = pneg %p117
        %p449 = pneg %p114
        %p450 = pneg %p138
        %p451 = pneg %p135
        %p452 = pneg %p159
        %p453 = pneg %p156
        %p454 = pneg %p180
        %p455 = pneg %p177
        %p456 = pneg %p201
        %p457 = pneg %p198
        %p458 = pneg %p222
        %p459 = pneg %p219
        %p460 = pneg %p250
        %p461 = pneg %p247
        %s462 = sand.u32 %s237, 1
        %s463 = scalar_lea.sflag [#allocation6], %s462
        %s464 = sand.u32 %s237, 1
        %s465 = smul.addr %s464, 8
        %s466 = scalar_lea.vmem [#allocation16], %s465
        %p467 = scmp.eq.s32.totalorder %s35, 0
        // Predicated region
        $region81: #{tpu_custom_call.1} parent=51 // pred_check
          %p468 = pneg %p467
        $region82: #{tpu_custom_call.1} parent=51 // pred_check_branch
          %470 = sbr.rel (%p468) target = $region84
        $region83: #{tpu_custom_call.1} parent=51 // pred_region
          %v471 = vld [vmem:[%s399] sm:$0xff]
          %v472 = vld [vmem:[#allocation12] sm:$0xff]
          %v473 = vld [vmem:[#allocation12 + $0x8] sm:$0xff]
          %v474 = vld [vmem:[#allocation12 + $0x10] sm:$0xff]
          %v475 = vld [vmem:[#allocation12 + $0x18] sm:$0xff]
          %vm476 = vcmask 261120
          %v478 = vsel %vm476, %v471, 0
          %480 = vmatprep.subr.mxu0 0.0
          %481 = vmatpush1.msra.mxu0 %v472
          %482 = vmatprep.subr.mxu0 0.0
          %483 = vmatpush1.msra.mxu0 %v473
          %484 = vmatprep.subr.mxu0 0.0
          %485 = vmatpush1.msra.mxu0 %v474
          %486 = vmatprep.subr.mxu0 0.0
          %487 = vmatpush1.msra.mxu0 %v475
          %488 = vmatprep.subr.mxu0 0.0
          %489 = vmatpush1.msra.mxu0 0.0
          %490 = vmatprep.subr.mxu0 0.0
          %491 = vmatpush1.msra.mxu0 0.0
          %492 = vmatprep.subr.mxu0 0.0
          %493 = vmatpush1.msra.mxu0 0.0
          %494 = vmatprep.subr.mxu0 0.0
          %495 = vmatpush1.msra.mxu0 0.0
          %496 = vmatprep.subr.mxu0 0.0
          %497 = vmatpush1.msra.mxu0 0.0
          %498 = vmatprep.subr.mxu0 0.0
          %499 = vmatpush1.msra.mxu0 0.0
          %500 = vmatprep.subr.mxu0 0.0
          %501 = vmatpush1.msra.mxu0 0.0
          %502 = vmatprep.subr.mxu0 0.0
          %503 = vmatpush1.msra.mxu0 0.0
          %504 = vmatprep.subr.mxu0 0.0
          %505 = vmatpush1.msra.mxu0 0.0
          %506 = vmatprep.subr.mxu0 0.0
          %507 = vmatpush1.msra.mxu0 0.0
          %508 = vmatprep.subr.mxu0 0.0
          %509 = vmatpush1.msra.mxu0 0.0
          %510 = vmatprep.subr.mxu0 0.0
          %511 = vmatpush1.msra.mxu0 0.0
          %512 = vmatprep.subr.mxu0 0.0
          %513 = vmatpush1.msra.mxu0 0.0
          %514 = vmatprep.subr.mxu0 0.0
          %515 = vmatpush1.msra.mxu0 0.0
          %516 = vmatprep.subr.mxu0 0.0
          %517 = vmatpush1.msra.mxu0 0.0
          %518 = vmatprep.subr.mxu0 0.0
          %519 = vmatpush1.msra.mxu0 0.0
          %520 = vmatprep.subr.mxu0 0.0
          %521 = vmatpush1.msra.mxu0 0.0
          %522 = vmatprep.subr.mxu0 0.0
          %523 = vmatpush1.msra.mxu0 0.0
          %524 = vmatprep.subr.mxu0 0.0
          %525 = vmatpush1.msra.mxu0 0.0
          %526 = vmatprep.subr.mxu0 0.0
          %527 = vmatpush1.msra.mxu0 0.0
          %528 = vmatprep.subr.mxu0 0.0
          %529 = vmatpush1.msra.mxu0 0.0
          %530 = vmatprep.subr.mxu0 0.0
          %531 = vmatpush1.msra.mxu0 0.0
          %532 = vmatprep.subr.mxu0 0.0
          %533 = vmatpush1.msra.mxu0 0.0
          %534 = vmatprep.subr.mxu0 0.0
          %535 = vmatpush1.msra.mxu0 0.0
          %536 = vmatprep.subr.mxu0 0.0
          %537 = vmatpush1.msra.mxu0 0.0
          %538 = vmatprep.subr.mxu0 0.0
          %539 = vmatpush1.msra.mxu0 0.0
          %540 = vmatprep.subr.mxu0 0.0
          %541 = vmatpush1.msra.mxu0 0.0
          %542 = vmatprep.subr.mxu0 0.0
          %543 = vmatpush1.msra.mxu0 0.0
          %544 = vmatprep.mubr.f32.mxu0 0.0
          %545 = vmatmul.mubr.f32.gmra.mrb[0].mxu0 %v478
          %v546 = vpop.f32.mrb[0].mxu0
          %v547 = vadd.f32 0.0, %v546
          %v548 = vpop.f32.mrb[0].mxu0
          %549 = vdwg.mxu0
          %550 = vst.msk [vmem:[#allocation2] sm:$0xff] %vm476, %v547
          %v551 = vld [vmem:[%s408] sm:$0xff]
          %v552 = vld [vmem:[#allocation13] sm:$0xff]
          %v553 = vld [vmem:[#allocation13 + $0x8] sm:$0xff]
          %v554 = vld [vmem:[#allocation13 + $0x10] sm:$0xff]
          %v555 = vld [vmem:[#allocation13 + $0x18] sm:$0xff]
          %v557 = vsel %vm476, %v551, 0
          %559 = vmatprep.subr.mxu0 0.0
          %560 = vmatpush1.msra.mxu0 %v552
          %561 = vmatprep.subr.mxu0 0.0
          %562 = vmatpush1.msra.mxu0 %v553
          %563 = vmatprep.subr.mxu0 0.0
          %564 = vmatpush1.msra.mxu0 %v554
          %565 = vmatprep.subr.mxu0 0.0
          %566 = vmatpush1.msra.mxu0 %v555
          %567 = vmatprep.subr.mxu0 0.0
          %568 = vmatpush1.msra.mxu0 0.0
          %569 = vmatprep.subr.mxu0 0.0
          %570 = vmatpush1.msra.mxu0 0.0
          %571 = vmatprep.subr.mxu0 0.0
          %572 = vmatpush1.msra.mxu0 0.0
          %573 = vmatprep.subr.mxu0 0.0
          %574 = vmatpush1.msra.mxu0 0.0
          %575 = vmatprep.subr.mxu0 0.0
          %576 = vmatpush1.msra.mxu0 0.0
          %577 = vmatprep.subr.mxu0 0.0
          %578 = vmatpush1.msra.mxu0 0.0
          %579 = vmatprep.subr.mxu0 0.0
          %580 = vmatpush1.msra.mxu0 0.0
          %581 = vmatprep.subr.mxu0 0.0
          %582 = vmatpush1.msra.mxu0 0.0
          %583 = vmatprep.subr.mxu0 0.0
          %584 = vmatpush1.msra.mxu0 0.0
          %585 = vmatprep.subr.mxu0 0.0
          %586 = vmatpush1.msra.mxu0 0.0
          %587 = vmatprep.subr.mxu0 0.0
          %588 = vmatpush1.msra.mxu0 0.0
          %589 = vmatprep.subr.mxu0 0.0
          %590 = vmatpush1.msra.mxu0 0.0
          %591 = vmatprep.subr.mxu0 0.0
          %592 = vmatpush1.msra.mxu0 0.0
          %593 = vmatprep.subr.mxu0 0.0
          %594 = vmatpush1.msra.mxu0 0.0
          %595 = vmatprep.subr.mxu0 0.0
          %596 = vmatpush1.msra.mxu0 0.0
          %597 = vmatprep.subr.mxu0 0.0
          %598 = vmatpush1.msra.mxu0 0.0
          %599 = vmatprep.subr.mxu0 0.0
          %600 = vmatpush1.msra.mxu0 0.0
          %601 = vmatprep.subr.mxu0 0.0
          %602 = vmatpush1.msra.mxu0 0.0
          %603 = vmatprep.subr.mxu0 0.0
          %604 = vmatpush1.msra.mxu0 0.0
          %605 = vmatprep.subr.mxu0 0.0
          %606 = vmatpush1.msra.mxu0 0.0
          %607 = vmatprep.subr.mxu0 0.0
          %608 = vmatpush1.msra.mxu0 0.0
          %609 = vmatprep.subr.mxu0 0.0
          %610 = vmatpush1.msra.mxu0 0.0
          %611 = vmatprep.subr.mxu0 0.0
          %612 = vmatpush1.msra.mxu0 0.0
          %613 = vmatprep.subr.mxu0 0.0
          %614 = vmatpush1.msra.mxu0 0.0
          %615 = vmatprep.subr.mxu0 0.0
          %616 = vmatpush1.msra.mxu0 0.0
          %617 = vmatprep.subr.mxu0 0.0
          %618 = vmatpush1.msra.mxu0 0.0
          %619 = vmatprep.subr.mxu0 0.0
          %620 = vmatpush1.msra.mxu0 0.0
          %621 = vmatprep.subr.mxu0 0.0
          %622 = vmatpush1.msra.mxu0 0.0
          %623 = vmatprep.mubr.f32.mxu0 0.0
          %624 = vmatmul.mubr.f32.gmra.mrb[0].mxu0 %v557
          %v625 = vpop.f32.mrb[0].mxu0
          %v626 = vadd.f32 0.0, %v625
          %v627 = vpop.f32.mrb[0].mxu0
          %628 = vdwg.mxu0
          %629 = vst.msk [vmem:[#allocation3] sm:$0xff] %vm476, %v626
        $region84: #{tpu_custom_call.1} parent=51 // pred_fallthru
          _
        %v630 = vld [vmem:[%s390] sm:$0xff]
        %v631 = vld [vmem:[#allocation10] sm:$0xff]
        %v632 = vld [vmem:[#allocation10 + $0x8] sm:$0xff]
        %v633 = vld [vmem:[#allocation10 + $0x10] sm:$0xff]
        %v634 = vld [vmem:[#allocation10 + $0x18] sm:$0xff]
        %vm635 = vcmask 261120
        %v637 = vsel %vm635, %v630, 0
        %639 = vmatprep.subr.mxu0 0.0
        %640 = vmatpush1.msra.mxu0 %v631
        %641 = vmatprep.subr.mxu0 0.0
        %642 = vmatpush1.msra.mxu0 %v632
        %643 = vmatprep.subr.mxu0 0.0
        %644 = vmatpush1.msra.mxu0 %v633
        %645 = vmatprep.subr.mxu0 0.0
        %646 = vmatpush1.msra.mxu0 %v634
        %647 = vmatprep.subr.mxu0 0.0
        %648 = vmatpush1.msra.mxu0 0.0
        %649 = vmatprep.subr.mxu0 0.0
        %650 = vmatpush1.msra.mxu0 0.0
        %651 = vmatprep.subr.mxu0 0.0
        %652 = vmatpush1.msra.mxu0 0.0
        %653 = vmatprep.subr.mxu0 0.0
        %654 = vmatpush1.msra.mxu0 0.0
        %655 = vmatprep.subr.mxu0 0.0
        %656 = vmatpush1.msra.mxu0 0.0
        %657 = vmatprep.subr.mxu0 0.0
        %658 = vmatpush1.msra.mxu0 0.0
        %659 = vmatprep.subr.mxu0 0.0
        %660 = vmatpush1.msra.mxu0 0.0
        %661 = vmatprep.subr.mxu0 0.0
        %662 = vmatpush1.msra.mxu0 0.0
        %663 = vmatprep.subr.mxu0 0.0
        %664 = vmatpush1.msra.mxu0 0.0
        %665 = vmatprep.subr.mxu0 0.0
        %666 = vmatpush1.msra.mxu0 0.0
        %667 = vmatprep.subr.mxu0 0.0
        %668 = vmatpush1.msra.mxu0 0.0
        %669 = vmatprep.subr.mxu0 0.0
        %670 = vmatpush1.msra.mxu0 0.0
        %671 = vmatprep.subr.mxu0 0.0
        %672 = vmatpush1.msra.mxu0 0.0
        %673 = vmatprep.subr.mxu0 0.0
        %674 = vmatpush1.msra.mxu0 0.0
        %675 = vmatprep.subr.mxu0 0.0
        %676 = vmatpush1.msra.mxu0 0.0
        %677 = vmatprep.subr.mxu0 0.0
        %678 = vmatpush1.msra.mxu0 0.0
        %679 = vmatprep.subr.mxu0 0.0
        %680 = vmatpush1.msra.mxu0 0.0
        %681 = vmatprep.subr.mxu0 0.0
        %682 = vmatpush1.msra.mxu0 0.0
        %683 = vmatprep.subr.mxu0 0.0
        %684 = vmatpush1.msra.mxu0 0.0
        %685 = vmatprep.subr.mxu0 0.0
        %686 = vmatpush1.msra.mxu0 0.0
        %687 = vmatprep.subr.mxu0 0.0
        %688 = vmatpush1.msra.mxu0 0.0
        %689 = vmatprep.subr.mxu0 0.0
        %690 = vmatpush1.msra.mxu0 0.0
        %691 = vmatprep.subr.mxu0 0.0
        %692 = vmatpush1.msra.mxu0 0.0
        %693 = vmatprep.subr.mxu0 0.0
        %694 = vmatpush1.msra.mxu0 0.0
        %695 = vmatprep.subr.mxu0 0.0
        %696 = vmatpush1.msra.mxu0 0.0
        %697 = vmatprep.subr.mxu0 0.0
        %698 = vmatpush1.msra.mxu0 0.0
        %699 = vmatprep.subr.mxu0 0.0
        %700 = vmatpush1.msra.mxu0 0.0
        %701 = vmatprep.subr.mxu0 0.0
        %702 = vmatpush1.msra.mxu0 0.0
        %703 = vmatprep.mubr.f32.mxu0 0.0
        %704 = vmatmul.mubr.f32.gmra.mrb[0].mxu0 %v637
        %v705 = vpop.f32.mrb[0].mxu0
        %v706 = vadd.f32 0.0, %v705
        %v707 = vpop.f32.mrb[0].mxu0
        %708 = vdwg.mxu0
        %v709 = vld [vmem:[#allocation2] sm:$0xff]
        %v710 = vld [vmem:[#allocation3] sm:$0xff]
        %vm711 = vcmask 64512
        %v713 = vsel %vm711, %v706, 0
        %v716 = vsel %vm711, %v709, 0
        %718 = vmatprep.subr.mxu0 0.0
        %719 = vmatpush1.xpose.msra.mxu0 %v716
        %720 = vmatprep.subr.mxu0 0.0
        %721 = vmatpush1.xpose.msra.mxu0 0.0
        %722 = vmatprep.subr.mxu0 0.0
        %723 = vmatpush1.xpose.msra.mxu0 0.0
        %724 = vmatprep.subr.mxu0 0.0
        %725 = vmatpush1.xpose.msra.mxu0 0.0
        %726 = vmatprep.subr.mxu0 0.0
        %727 = vmatpush1.xpose.msra.mxu0 0.0
        %728 = vmatprep.subr.mxu0 0.0
        %729 = vmatpush1.xpose.msra.mxu0 0.0
        %730 = vmatprep.subr.mxu0 0.0
        %731 = vmatpush1.xpose.msra.mxu0 0.0
        %732 = vmatprep.subr.mxu0 0.0
        %733 = vmatpush1.xpose.msra.mxu0 0.0
        %734 = vmatprep.subr.mxu0 0.0
        %735 = vmatpush1.xpose.msra.mxu0 0.0
        %736 = vmatprep.subr.mxu0 0.0
        %737 = vmatpush1.xpose.msra.mxu0 0.0
        %738 = vmatprep.subr.mxu0 0.0
        %739 = vmatpush1.xpose.msra.mxu0 0.0
        %740 = vmatprep.subr.mxu0 0.0
        %741 = vmatpush1.xpose.msra.mxu0 0.0
        %742 = vmatprep.subr.mxu0 0.0
        %743 = vmatpush1.xpose.msra.mxu0 0.0
        %744 = vmatprep.subr.mxu0 0.0
        %745 = vmatpush1.xpose.msra.mxu0 0.0
        %746 = vmatprep.subr.mxu0 0.0
        %747 = vmatpush1.xpose.msra.mxu0 0.0
        %748 = vmatprep.subr.mxu0 0.0
        %749 = vmatpush1.xpose.msra.mxu0 0.0
        %750 = vmatprep.subr.mxu0 0.0
        %751 = vmatpush1.xpose.msra.mxu0 0.0
        %752 = vmatprep.subr.mxu0 0.0
        %753 = vmatpush1.xpose.msra.mxu0 0.0
        %754 = vmatprep.subr.mxu0 0.0
        %755 = vmatpush1.xpose.msra.mxu0 0.0
        %756 = vmatprep.subr.mxu0 0.0
        %757 = vmatpush1.xpose.msra.mxu0 0.0
        %758 = vmatprep.subr.mxu0 0.0
        %759 = vmatpush1.xpose.msra.mxu0 0.0
        %760 = vmatprep.subr.mxu0 0.0
        %761 = vmatpush1.xpose.msra.mxu0 0.0
        %762 = vmatprep.subr.mxu0 0.0
        %763 = vmatpush1.xpose.msra.mxu0 0.0
        %764 = vmatprep.subr.mxu0 0.0
        %765 = vmatpush1.xpose.msra.mxu0 0.0
        %766 = vmatprep.subr.mxu0 0.0
        %767 = vmatpush1.xpose.msra.mxu0 0.0
        %768 = vmatprep.subr.mxu0 0.0
        %769 = vmatpush1.xpose.msra.mxu0 0.0
        %770 = vmatprep.subr.mxu0 0.0
        %771 = vmatpush1.xpose.msra.mxu0 0.0
        %772 = vmatprep.subr.mxu0 0.0
        %773 = vmatpush1.xpose.msra.mxu0 0.0
        %774 = vmatprep.subr.mxu0 0.0
        %775 = vmatpush1.xpose.msra.mxu0 0.0
        %776 = vmatprep.subr.mxu0 0.0
        %777 = vmatpush1.xpose.msra.mxu0 0.0
        %778 = vmatprep.subr.mxu0 0.0
        %779 = vmatpush1.xpose.msra.mxu0 0.0
        %780 = vmatprep.subr.mxu0 0.0
        %781 = vmatpush1.xpose.msra.mxu0 0.0
        %782 = vmatprep.mubr.f32.mxu0 0.0
        %783 = vmatmul.mubr.f32.gmra.mrb[0].mxu0 %v713
        %v784 = vpop.f32.mrb[0].mxu0
        %v785 = vadd.f32 0.0, %v784
        %v786 = vpop.f32.mrb[0].mxu0
        %787 = vdwg.mxu0
        %v788 = vsel %vm711, %v785, -inf
        %789 = vmax.xlane.f32.xlu0 %v788
        %v790 = vpop.xlane.xlu0 %789
        %v791 = vsub.f32 %v785, %v790
        %v792 = vmul.f32 %v791, 1.442695
        %v793 = vpow.pop %v792
        %v794 = vsel %vm711, %v793, 0.0
        %795 = vadd.xlane.f32.xlu0 %v794
        %v796 = vpop.xlane.xlu0 %795
        %v797 = vrcp.pop %v796
        %v798 = vmul.f32 1.0, %v797
        %v799 = vmul.f32 %v793, %v798
        %v801 = vsel %vm711, %v799, 0
        %803 = vmatprep.subr.mxu0 0.0
        %804 = vmatpush1.msra.mxu0 %v710
        %805 = vmatprep.subr.mxu0 0.0
        %806 = vmatpush1.msra.mxu0 0.0
        %807 = vmatprep.subr.mxu0 0.0
        %808 = vmatpush1.msra.mxu0 0.0
        %809 = vmatprep.subr.mxu0 0.0
        %810 = vmatpush1.msra.mxu0 0.0
        %811 = vmatprep.subr.mxu0 0.0
        %812 = vmatpush1.msra.mxu0 0.0
        %813 = vmatprep.subr.mxu0 0.0
        %814 = vmatpush1.msra.mxu0 0.0
        %815 = vmatprep.subr.mxu0 0.0
        %816 = vmatpush1.msra.mxu0 0.0
        %817 = vmatprep.subr.mxu0 0.0
        %818 = vmatpush1.msra.mxu0 0.0
        %819 = vmatprep.subr.mxu0 0.0
        %820 = vmatpush1.msra.mxu0 0.0
        %821 = vmatprep.subr.mxu0 0.0
        %822 = vmatpush1.msra.mxu0 0.0
        %823 = vmatprep.subr.mxu0 0.0
        %824 = vmatpush1.msra.mxu0 0.0
        %825 = vmatprep.subr.mxu0 0.0
        %826 = vmatpush1.msra.mxu0 0.0
        %827 = vmatprep.subr.mxu0 0.0
        %828 = vmatpush1.msra.mxu0 0.0
        %829 = vmatprep.subr.mxu0 0.0
        %830 = vmatpush1.msra.mxu0 0.0
        %831 = vmatprep.subr.mxu0 0.0
        %832 = vmatpush1.msra.mxu0 0.0
        %833 = vmatprep.subr.mxu0 0.0
        %834 = vmatpush1.msra.mxu0 0.0
        %835 = vmatprep.subr.mxu0 0.0
        %836 = vmatpush1.msra.mxu0 0.0
        %837 = vmatprep.subr.mxu0 0.0
        %838 = vmatpush1.msra.mxu0 0.0
        %839 = vmatprep.subr.mxu0 0.0
        %840 = vmatpush1.msra.mxu0 0.0
        %841 = vmatprep.subr.mxu0 0.0
        %842 = vmatpush1.msra.mxu0 0.0
        %843 = vmatprep.subr.mxu0 0.0
        %844 = vmatpush1.msra.mxu0 0.0
        %845 = vmatprep.subr.mxu0 0.0
        %846 = vmatpush1.msra.mxu0 0.0
        %847 = vmatprep.subr.mxu0 0.0
        %848 = vmatpush1.msra.mxu0 0.0
        %849 = vmatprep.subr.mxu0 0.0
        %850 = vmatpush1.msra.mxu0 0.0
        %851 = vmatprep.subr.mxu0 0.0
        %852 = vmatpush1.msra.mxu0 0.0
        %853 = vmatprep.subr.mxu0 0.0
        %854 = vmatpush1.msra.mxu0 0.0
        %855 = vmatprep.subr.mxu0 0.0
        %856 = vmatpush1.msra.mxu0 0.0
        %857 = vmatprep.subr.mxu0 0.0
        %858 = vmatpush1.msra.mxu0 0.0
        %859 = vmatprep.subr.mxu0 0.0
        %860 = vmatpush1.msra.mxu0 0.0
        %861 = vmatprep.subr.mxu0 0.0
        %862 = vmatpush1.msra.mxu0 0.0
        %863 = vmatprep.subr.mxu0 0.0
        %864 = vmatpush1.msra.mxu0 0.0
        %865 = vmatprep.subr.mxu0 0.0
        %866 = vmatpush1.msra.mxu0 0.0
        %867 = vmatprep.mubr.f32.mxu0 0.0
        %868 = vmatmul.mubr.f32.gmra.mrb[0].mxu0 %v801
        %v869 = vpop.f32.mrb[0].mxu0
        %v870 = vadd.f32 0.0, %v869
        %v871 = vpop.f32.mrb[0].mxu0
        %872 = vdwg.mxu0
        %873 = vrot.lane.b32.xlu0 %v706, 120
        %v874 = vpop.permute.xlu0 %873
        %875 = vrot.lane.b32.xlu0 %v709, 120
        %v876 = vpop.permute.xlu0 %875
        %v877 = vsel %vm711, %v874, 0
        %v879 = vsel %vm711, %v876, 0
        %881 = vmatprep.subr.mxu0 0.0
        %882 = vmatpush1.xpose.msra.mxu0 %v879
        %883 = vmatprep.subr.mxu0 0.0
        %884 = vmatpush1.xpose.msra.mxu0 0.0
        %885 = vmatprep.subr.mxu0 0.0
        %886 = vmatpush1.xpose.msra.mxu0 0.0
        %887 = vmatprep.subr.mxu0 0.0
        %888 = vmatpush1.xpose.msra.mxu0 0.0
        %889 = vmatprep.subr.mxu0 0.0
        %890 = vmatpush1.xpose.msra.mxu0 0.0
        %891 = vmatprep.subr.mxu0 0.0
        %892 = vmatpush1.xpose.msra.mxu0 0.0
        %893 = vmatprep.subr.mxu0 0.0
        %894 = vmatpush1.xpose.msra.mxu0 0.0
        %895 = vmatprep.subr.mxu0 0.0
        %896 = vmatpush1.xpose.msra.mxu0 0.0
        %897 = vmatprep.subr.mxu0 0.0
        %898 = vmatpush1.xpose.msra.mxu0 0.0
        %899 = vmatprep.subr.mxu0 0.0
        %900 = vmatpush1.xpose.msra.mxu0 0.0
        %901 = vmatprep.subr.mxu0 0.0
        %902 = vmatpush1.xpose.msra.mxu0 0.0
        %903 = vmatprep.subr.mxu0 0.0
        %904 = vmatpush1.xpose.msra.mxu0 0.0
        %905 = vmatprep.subr.mxu0 0.0
        %906 = vmatpush1.xpose.msra.mxu0 0.0
        %907 = vmatprep.subr.mxu0 0.0
        %908 = vmatpush1.xpose.msra.mxu0 0.0
        %909 = vmatprep.subr.mxu0 0.0
        %910 = vmatpush1.xpose.msra.mxu0 0.0
        %911 = vmatprep.subr.mxu0 0.0
        %912 = vmatpush1.xpose.msra.mxu0 0.0
        %913 = vmatprep.subr.mxu0 0.0
        %914 = vmatpush1.xpose.msra.mxu0 0.0
        %915 = vmatprep.subr.mxu0 0.0
        %916 = vmatpush1.xpose.msra.mxu0 0.0
        %917 = vmatprep.subr.mxu0 0.0
        %918 = vmatpush1.xpose.msra.mxu0 0.0
        %919 = vmatprep.subr.mxu0 0.0
        %920 = vmatpush1.xpose.msra.mxu0 0.0
        %921 = vmatprep.subr.mxu0 0.0
        %922 = vmatpush1.xpose.msra.mxu0 0.0
        %923 = vmatprep.subr.mxu0 0.0
        %924 = vmatpush1.xpose.msra.mxu0 0.0
        %925 = vmatprep.subr.mxu0 0.0
        %926 = vmatpush1.xpose.msra.mxu0 0.0
        %927 = vmatprep.subr.mxu0 0.0
        %928 = vmatpush1.xpose.msra.mxu0 0.0
        %929 = vmatprep.subr.mxu0 0.0
        %930 = vmatpush1.xpose.msra.mxu0 0.0
        %931 = vmatprep.subr.mxu0 0.0
        %932 = vmatpush1.xpose.msra.mxu0 0.0
        %933 = vmatprep.subr.mxu0 0.0
        %934 = vmatpush1.xpose.msra.mxu0 0.0
        %935 = vmatprep.subr.mxu0 0.0
        %936 = vmatpush1.xpose.msra.mxu0 0.0
        %937 = vmatprep.subr.mxu0 0.0
        %938 = vmatpush1.xpose.msra.mxu0 0.0
        %939 = vmatprep.subr.mxu0 0.0
        %940 = vmatpush1.xpose.msra.mxu0 0.0
        %941 = vmatprep.subr.mxu0 0.0
        %942 = vmatpush1.xpose.msra.mxu0 0.0
        %943 = vmatprep.subr.mxu0 0.0
        %944 = vmatpush1.xpose.msra.mxu0 0.0
        %945 = vmatprep.mubr.f32.mxu0 0.0
        %946 = vmatmul.mubr.f32.gmra.mrb[0].mxu0 %v877
        %v947 = vpop.f32.mrb[0].mxu0
        %v948 = vadd.f32 0.0, %v947
        %v949 = vpop.f32.mrb[0].mxu0
        %950 = vdwg.mxu0
        %v951 = vsel %vm711, %v948, -inf
        %952 = vmax.xlane.f32.xlu0 %v951
        %v953 = vpop.xlane.xlu0 %952
        %v954 = vsub.f32 %v948, %v953
        %v955 = vmul.f32 %v954, 1.442695
        %v956 = vpow.pop %v955
        %v957 = vsel %vm711, %v956, 0.0
        %958 = vadd.xlane.f32.xlu0 %v957
        %v959 = vpop.xlane.xlu0 %958
        %v960 = vrcp.pop %v959
        %v961 = vmul.f32 1.0, %v960
        %v962 = vmul.f32 %v956, %v961
        %964 = vrot.lane.b32.xlu0 %v710, 120
        %v965 = vpop.permute.xlu0 %964
        %v968 = vsel %vm711, %v962, 0
        %970 = vmatprep.subr.mxu0 0.0
        %971 = vmatpush1.msra.mxu0 %v965
        %972 = vmatprep.subr.mxu0 0.0
        %973 = vmatpush1.msra.mxu0 0.0
        %974 = vmatprep.subr.mxu0 0.0
        %975 = vmatpush1.msra.mxu0 0.0
        %976 = vmatprep.subr.mxu0 0.0
        %977 = vmatpush1.msra.mxu0 0.0
        %978 = vmatprep.subr.mxu0 0.0
        %979 = vmatpush1.msra.mxu0 0.0
        %980 = vmatprep.subr.mxu0 0.0
        %981 = vmatpush1.msra.mxu0 0.0
        %982 = vmatprep.subr.mxu0 0.0
        %983 = vmatpush1.msra.mxu0 0.0
        %984 = vmatprep.subr.mxu0 0.0
        %985 = vmatpush1.msra.mxu0 0.0
        %986 = vmatprep.subr.mxu0 0.0
        %987 = vmatpush1.msra.mxu0 0.0
        %988 = vmatprep.subr.mxu0 0.0
        %989 = vmatpush1.msra.mxu0 0.0
        %990 = vmatprep.subr.mxu0 0.0
        %991 = vmatpush1.msra.mxu0 0.0
        %992 = vmatprep.subr.mxu0 0.0
        %993 = vmatpush1.msra.mxu0 0.0
        %994 = vmatprep.subr.mxu0 0.0
        %995 = vmatpush1.msra.mxu0 0.0
        %996 = vmatprep.subr.mxu0 0.0
        %997 = vmatpush1.msra.mxu0 0.0
        %998 = vmatprep.subr.mxu0 0.0
        %999 = vmatpush1.msra.mxu0 0.0
        %1000 = vmatprep.subr.mxu0 0.0
        %1001 = vmatpush1.msra.mxu0 0.0
        %1002 = vmatprep.subr.mxu0 0.0
        %1003 = vmatpush1.msra.mxu0 0.0
        %1004 = vmatprep.subr.mxu0 0.0
        %1005 = vmatpush1.msra.mxu0 0.0
        %1006 = vmatprep.subr.mxu0 0.0
        %1007 = vmatpush1.msra.mxu0 0.0
        %1008 = vmatprep.subr.mxu0 0.0
        %1009 = vmatpush1.msra.mxu0 0.0
        %1010 = vmatprep.subr.mxu0 0.0
        %1011 = vmatpush1.msra.mxu0 0.0
        %1012 = vmatprep.subr.mxu0 0.0
        %1013 = vmatpush1.msra.mxu0 0.0
        %1014 = vmatprep.subr.mxu0 0.0
        %1015 = vmatpush1.msra.mxu0 0.0
        %1016 = vmatprep.subr.mxu0 0.0
        %1017 = vmatpush1.msra.mxu0 0.0
        %1018 = vmatprep.subr.mxu0 0.0
        %1019 = vmatpush1.msra.mxu0 0.0
        %1020 = vmatprep.subr.mxu0 0.0
        %1021 = vmatpush1.msra.mxu0 0.0
        %1022 = vmatprep.subr.mxu0 0.0
        %1023 = vmatpush1.msra.mxu0 0.0
        %1024 = vmatprep.subr.mxu0 0.0
        %1025 = vmatpush1.msra.mxu0 0.0
        %1026 = vmatprep.subr.mxu0 0.0
        %1027 = vmatpush1.msra.mxu0 0.0
        %1028 = vmatprep.subr.mxu0 0.0
        %1029 = vmatpush1.msra.mxu0 0.0
        %1030 = vmatprep.subr.mxu0 0.0
        %1031 = vmatpush1.msra.mxu0 0.0
        %1032 = vmatprep.subr.mxu0 0.0
        %1033 = vmatpush1.msra.mxu0 0.0
        %1034 = vmatprep.mubr.f32.mxu0 0.0
        %1035 = vmatmul.mubr.f32.gmra.mrb[0].mxu0 %v968
        %v1036 = vpop.f32.mrb[0].mxu0
        %v1037 = vadd.f32 0.0, %v1036
        %v1038 = vpop.f32.mrb[0].mxu0
        %1039 = vdwg.mxu0
        %1040 = vrot.lane.b32.xlu0 %v706, 112
        %v1041 = vpop.permute.xlu0 %1040
        %1042 = vrot.lane.b32.xlu0 %v709, 112
        %v1043 = vpop.permute.xlu0 %1042
        %v1044 = vsel %vm711, %v1041, 0
        %v1046 = vsel %vm711, %v1043, 0
        %1048 = vmatprep.subr.mxu0 0.0
        %1049 = vmatpush1.xpose.msra.mxu0 %v1046
        %1050 = vmatprep.subr.mxu0 0.0
        %1051 = vmatpush1.xpose.msra.mxu0 0.0
        %1052 = vmatprep.subr.mxu0 0.0
        %1053 = vmatpush1.xpose.msra.mxu0 0.0
        %1054 = vmatprep.subr.mxu0 0.0
        %1055 = vmatpush1.xpose.msra.mxu0 0.0
        %1056 = vmatprep.subr.mxu0 0.0
        %1057 = vmatpush1.xpose.msra.mxu0 0.0
        %1058 = vmatprep.subr.mxu0 0.0
        %1059 = vmatpush1.xpose.msra.mxu0 0.0
        %1060 = vmatprep.subr.mxu0 0.0
        %1061 = vmatpush1.xpose.msra.mxu0 0.0
        %1062 = vmatprep.subr.mxu0 0.0
        %1063 = vmatpush1.xpose.msra.mxu0 0.0
        %1064 = vmatprep.subr.mxu0 0.0
        %1065 = vmatpush1.xpose.msra.mxu0 0.0
        %1066 = vmatprep.subr.mxu0 0.0
        %1067 = vmatpush1.xpose.msra.mxu0 0.0
        %1068 = vmatprep.subr.mxu0 0.0
        %1069 = vmatpush1.xpose.msra.mxu0 0.0
        %1070 = vmatprep.subr.mxu0 0.0
        %1071 = vmatpush1.xpose.msra.mxu0 0.0
        %1072 = vmatprep.subr.mxu0 0.0
        %1073 = vmatpush1.xpose.msra.mxu0 0.0
        %1074 = vmatprep.subr.mxu0 0.0
        %1075 = vmatpush1.xpose.msra.mxu0 0.0
        %1076 = vmatprep.subr.mxu0 0.0
        %1077 = vmatpush1.xpose.msra.mxu0 0.0
        %1078 = vmatprep.subr.mxu0 0.0
        %1079 = vmatpush1.xpose.msra.mxu0 0.0
        %1080 = vmatprep.subr.mxu0 0.0
        %1081 = vmatpush1.xpose.msra.mxu0 0.0
        %1082 = vmatprep.subr.mxu0 0.0
        %1083 = vmatpush1.xpose.msra.mxu0 0.0
        %1084 = vmatprep.subr.mxu0 0.0
        %1085 = vmatpush1.xpose.msra.mxu0 0.0
        %1086 = vmatprep.subr.mxu0 0.0
        %1087 = vmatpush1.xpose.msra.mxu0 0.0
        %1088 = vmatprep.subr.mxu0 0.0
        %1089 = vmatpush1.xpose.msra.mxu0 0.0
        %1090 = vmatprep.subr.mxu0 0.0
        %1091 = vmatpush1.xpose.msra.mxu0 0.0
        %1092 = vmatprep.subr.mxu0 0.0
        %1093 = vmatpush1.xpose.msra.mxu0 0.0
        %1094 = vmatprep.subr.mxu0 0.0
        %1095 = vmatpush1.xpose.msra.mxu0 0.0
        %1096 = vmatprep.subr.mxu0 0.0
        %1097 = vmatpush1.xpose.msra.mxu0 0.0
        %1098 = vmatprep.subr.mxu0 0.0
        %1099 = vmatpush1.xpose.msra.mxu0 0.0
        %1100 = vmatprep.subr.mxu0 0.0
        %1101 = vmatpush1.xpose.msra.mxu0 0.0
        %1102 = vmatprep.subr.mxu0 0.0
        %1103 = vmatpush1.xpose.msra.mxu0 0.0
        %1104 = vmatprep.subr.mxu0 0.0
        %1105 = vmatpush1.xpose.msra.mxu0 0.0
        %1106 = vmatprep.subr.mxu0 0.0
        %1107 = vmatpush1.xpose.msra.mxu0 0.0
        %1108 = vmatprep.subr.mxu0 0.0
        %1109 = vmatpush1.xpose.msra.mxu0 0.0
        %1110 = vmatprep.subr.mxu0 0.0
        %1111 = vmatpush1.xpose.msra.mxu0 0.0
        %1112 = vmatprep.mubr.f32.mxu0 0.0
        %1113 = vmatmul.mubr.f32.gmra.mrb[0].mxu0 %v1044
        %v1114 = vpop.f32.mrb[0].mxu0
        %v1115 = vadd.f32 0.0, %v1114
        %v1116 = vpop.f32.mrb[0].mxu0
        %1117 = vdwg.mxu0
        %v1118 = vsel %vm711, %v1115, -inf
        %1119 = vmax.xlane.f32.xlu0 %v1118
        %v1120 = vpop.xlane.xlu0 %1119
        %v1121 = vsub.f32 %v1115, %v1120
        %v1122 = vmul.f32 %v1121, 1.442695
        %v1123 = vpow.pop %v1122
        %v1124 = vsel %vm711, %v1123, 0.0
        %1125 = vadd.xlane.f32.xlu0 %v1124
        %v1126 = vpop.xlane.xlu0 %1125
        %v1127 = vrcp.pop %v1126
        %v1128 = vmul.f32 1.0, %v1127
        %v1129 = vmul.f32 %v1123, %v1128
        %1130 = vrot.lane.b32.xlu0 %v710, 112
        %v1131 = vpop.permute.xlu0 %1130
        %v1134 = vsel %vm711, %v1129, 0
        %1136 = vmatprep.subr.mxu0 0.0
        %1137 = vmatpush1.msra.mxu0 %v1131
        %1138 = vmatprep.subr.mxu0 0.0
        %1139 = vmatpush1.msra.mxu0 0.0
        %1140 = vmatprep.subr.mxu0 0.0
        %1141 = vmatpush1.msra.mxu0 0.0
        %1142 = vmatprep.subr.mxu0 0.0
        %1143 = vmatpush1.msra.mxu0 0.0
        %1144 = vmatprep.subr.mxu0 0.0
        %1145 = vmatpush1.msra.mxu0 0.0
        %1146 = vmatprep.subr.mxu0 0.0
        %1147 = vmatpush1.msra.mxu0 0.0
        %1148 = vmatprep.subr.mxu0 0.0
        %1149 = vmatpush1.msra.mxu0 0.0
        %1150 = vmatprep.subr.mxu0 0.0
        %1151 = vmatpush1.msra.mxu0 0.0
        %1152 = vmatprep.subr.mxu0 0.0
        %1153 = vmatpush1.msra.mxu0 0.0
        %1154 = vmatprep.subr.mxu0 0.0
        %1155 = vmatpush1.msra.mxu0 0.0
        %1156 = vmatprep.subr.mxu0 0.0
        %1157 = vmatpush1.msra.mxu0 0.0
        %1158 = vmatprep.subr.mxu0 0.0
        %1159 = vmatpush1.msra.mxu0 0.0
        %1160 = vmatprep.subr.mxu0 0.0
        %1161 = vmatpush1.msra.mxu0 0.0
        %1162 = vmatprep.subr.mxu0 0.0
        %1163 = vmatpush1.msra.mxu0 0.0
        %1164 = vmatprep.subr.mxu0 0.0
        %1165 = vmatpush1.msra.mxu0 0.0
        %1166 = vmatprep.subr.mxu0 0.0
        %1167 = vmatpush1.msra.mxu0 0.0
        %1168 = vmatprep.subr.mxu0 0.0
        %1169 = vmatpush1.msra.mxu0 0.0
        %1170 = vmatprep.subr.mxu0 0.0
        %1171 = vmatpush1.msra.mxu0 0.0
        %1172 = vmatprep.subr.mxu0 0.0
        %1173 = vmatpush1.msra.mxu0 0.0
        %1174 = vmatprep.subr.mxu0 0.0
        %1175 = vmatpush1.msra.mxu0 0.0
        %1176 = vmatprep.subr.mxu0 0.0
        %1177 = vmatpush1.msra.mxu0 0.0
        %1178 = vmatprep.subr.mxu0 0.0
        %1179 = vmatpush1.msra.mxu0 0.0
        %1180 = vmatprep.subr.mxu0 0.0
        %1181 = vmatpush1.msra.mxu0 0.0
        %1182 = vmatprep.subr.mxu0 0.0
        %1183 = vmatpush1.msra.mxu0 0.0
        %1184 = vmatprep.subr.mxu0 0.0
        %1185 = vmatpush1.msra.mxu0 0.0
        %1186 = vmatprep.subr.mxu0 0.0
        %1187 = vmatpush1.msra.mxu0 0.0
        %1188 = vmatprep.subr.mxu0 0.0
        %1189 = vmatpush1.msra.mxu0 0.0
        %1190 = vmatprep.subr.mxu0 0.0
        %1191 = vmatpush1.msra.mxu0 0.0
        %1192 = vmatprep.subr.mxu0 0.0
        %1193 = vmatpush1.msra.mxu0 0.0
        %1194 = vmatprep.subr.mxu0 0.0
        %1195 = vmatpush1.msra.mxu0 0.0
        %1196 = vmatprep.subr.mxu0 0.0
        %1197 = vmatpush1.msra.mxu0 0.0
        %1198 = vmatprep.subr.mxu0 0.0
        %1199 = vmatpush1.msra.mxu0 0.0
        %1200 = vmatprep.mubr.f32.mxu0 0.0
        %1201 = vmatmul.mubr.f32.gmra.mrb[0].mxu0 %v1134
        %v1202 = vpop.f32.mrb[0].mxu0
        %v1203 = vadd.f32 0.0, %v1202
        %v1204 = vpop.f32.mrb[0].mxu0
        %1205 = vdwg.mxu0
        %1206 = vrot.lane.b32.xlu0 %v706, 104
        %v1207 = vpop.permute.xlu0 %1206
        %1208 = vrot.lane.b32.xlu0 %v709, 104
        %v1209 = vpop.permute.xlu0 %1208
        %v1210 = vsel %vm711, %v1207, 0
        %v1212 = vsel %vm711, %v1209, 0
        %1214 = vmatprep.subr.mxu0 0.0
        %1215 = vmatpush1.xpose.msra.mxu0 %v1212
        %1216 = vmatprep.subr.mxu0 0.0
        %1217 = vmatpush1.xpose.msra.mxu0 0.0
        %1218 = vmatprep.subr.mxu0 0.0
        %1219 = vmatpush1.xpose.msra.mxu0 0.0
        %1220 = vmatprep.subr.mxu0 0.0
        %1221 = vmatpush1.xpose.msra.mxu0 0.0
        %1222 = vmatprep.subr.mxu0 0.0
        %1223 = vmatpush1.xpose.msra.mxu0 0.0
        %1224 = vmatprep.subr.mxu0 0.0
        %1225 = vmatpush1.xpose.msra.mxu0 0.0
        %1226 = vmatprep.subr.mxu0 0.0
        %1227 = vmatpush1.xpose.msra.mxu0 0.0
        %1228 = vmatprep.subr.mxu0 0.0
        %1229 = vmatpush1.xpose.msra.mxu0 0.0
        %1230 = vmatprep.subr.mxu0 0.0
        %1231 = vmatpush1.xpose.msra.mxu0 0.0
        %1232 = vmatprep.subr.mxu0 0.0
        %1233 = vmatpush1.xpose.msra.mxu0 0.0
        %1234 = vmatprep.subr.mxu0 0.0
        %1235 = vmatpush1.xpose.msra.mxu0 0.0
        %1236 = vmatprep.subr.mxu0 0.0
        %1237 = vmatpush1.xpose.msra.mxu0 0.0
        %1238 = vmatprep.subr.mxu0 0.0
        %1239 = vmatpush1.xpose.msra.mxu0 0.0
        %1240 = vmatprep.subr.mxu0 0.0
        %1241 = vmatpush1.xpose.msra.mxu0 0.0
        %1242 = vmatprep.subr.mxu0 0.0
        %1243 = vmatpush1.xpose.msra.mxu0 0.0
        %1244 = vmatprep.subr.mxu0 0.0
        %1245 = vmatpush1.xpose.msra.mxu0 0.0
        %1246 = vmatprep.subr.mxu0 0.0
        %1247 = vmatpush1.xpose.msra.mxu0 0.0
        %1248 = vmatprep.subr.mxu0 0.0
        %1249 = vmatpush1.xpose.msra.mxu0 0.0
        %1250 = vmatprep.subr.mxu0 0.0
        %1251 = vmatpush1.xpose.msra.mxu0 0.0
        %1252 = vmatprep.subr.mxu0 0.0
        %1253 = vmatpush1.xpose.msra.mxu0 0.0
        %1254 = vmatprep.subr.mxu0 0.0
        %1255 = vmatpush1.xpose.msra.mxu0 0.0
        %1256 = vmatprep.subr.mxu0 0.0
        %1257 = vmatpush1.xpose.msra.mxu0 0.0
        %1258 = vmatprep.subr.mxu0 0.0
        %1259 = vmatpush1.xpose.msra.mxu0 0.0
        %1260 = vmatprep.subr.mxu0 0.0
        %1261 = vmatpush1.xpose.msra.mxu0 0.0
        %1262 = vmatprep.subr.mxu0 0.0
        %1263 = vmatpush1.xpose.msra.mxu0 0.0
        %1264 = vmatprep.subr.mxu0 0.0
        %1265 = vmatpush1.xpose.msra.mxu0 0.0
        %1266 = vmatprep.subr.mxu0 0.0
        %1267 = vmatpush1.xpose.msra.mxu0 0.0
        %1268 = vmatprep.subr.mxu0 0.0
        %1269 = vmatpush1.xpose.msra.mxu0 0.0
        %1270 = vmatprep.subr.mxu0 0.0
        %1271 = vmatpush1.xpose.msra.mxu0 0.0
        %1272 = vmatprep.subr.mxu0 0.0
        %1273 = vmatpush1.xpose.msra.mxu0 0.0
        %1274 = vmatprep.subr.mxu0 0.0
        %1275 = vmatpush1.xpose.msra.mxu0 0.0
        %1276 = vmatprep.subr.mxu0 0.0
        %1277 = vmatpush1.xpose.msra.mxu0 0.0
        %1278 = vmatprep.mubr.f32.mxu0 0.0
        %1279 = vmatmul.mubr.f32.gmra.mrb[0].mxu0 %v1210
        %v1280 = vpop.f32.mrb[0].mxu0
        %v1281 = vadd.f32 0.0, %v1280
        %v1282 = vpop.f32.mrb[0].mxu0
        %1283 = vdwg.mxu0
        %v1284 = vsel %vm711, %v1281, -inf
        %1285 = vmax.xlane.f32.xlu0 %v1284
        %v1286 = vpop.xlane.xlu0 %1285
        %v1287 = vsub.f32 %v1281, %v1286
        %v1288 = vmul.f32 %v1287, 1.442695
        %v1289 = vpow.pop %v1288
        %v1290 = vsel %vm711, %v1289, 0.0
        %1291 = vadd.xlane.f32.xlu0 %v1290
        %v1292 = vpop.xlane.xlu0 %1291
        %v1293 = vrcp.pop %v1292
        %v1294 = vmul.f32 1.0, %v1293
        %v1295 = vmul.f32 %v1289, %v1294
        %1296 = vrot.lane.b32.xlu0 %v710, 104
        %v1297 = vpop.permute.xlu0 %1296
        %v1300 = vsel %vm711, %v1295, 0
        %1302 = vmatprep.subr.mxu0 0.0
        %1303 = vmatpush1.msra.mxu0 %v1297
        %1304 = vmatprep.subr.mxu0 0.0
        %1305 = vmatpush1.msra.mxu0 0.0
        %1306 = vmatprep.subr.mxu0 0.0
        %1307 = vmatpush1.msra.mxu0 0.0
        %1308 = vmatprep.subr.mxu0 0.0
        %1309 = vmatpush1.msra.mxu0 0.0
        %1310 = vmatprep.subr.mxu0 0.0
        %1311 = vmatpush1.msra.mxu0 0.0
        %1312 = vmatprep.subr.mxu0 0.0
        %1313 = vmatpush1.msra.mxu0 0.0
        %1314 = vmatprep.subr.mxu0 0.0
        %1315 = vmatpush1.msra.mxu0 0.0
        %1316 = vmatprep.subr.mxu0 0.0
        %1317 = vmatpush1.msra.mxu0 0.0
        %1318 = vmatprep.subr.mxu0 0.0
        %1319 = vmatpush1.msra.mxu0 0.0
        %1320 = vmatprep.subr.mxu0 0.0
        %1321 = vmatpush1.msra.mxu0 0.0
        %1322 = vmatprep.subr.mxu0 0.0
        %1323 = vmatpush1.msra.mxu0 0.0
        %1324 = vmatprep.subr.mxu0 0.0
        %1325 = vmatpush1.msra.mxu0 0.0
        %1326 = vmatprep.subr.mxu0 0.0
        %1327 = vmatpush1.msra.mxu0 0.0
        %1328 = vmatprep.subr.mxu0 0.0
        %1329 = vmatpush1.msra.mxu0 0.0
        %1330 = vmatprep.subr.mxu0 0.0
        %1331 = vmatpush1.msra.mxu0 0.0
        %1332 = vmatprep.subr.mxu0 0.0
        %1333 = vmatpush1.msra.mxu0 0.0
        %1334 = vmatprep.subr.mxu0 0.0
        %1335 = vmatpush1.msra.mxu0 0.0
        %1336 = vmatprep.subr.mxu0 0.0
        %1337 = vmatpush1.msra.mxu0 0.0
        %1338 = vmatprep.subr.mxu0 0.0
        %1339 = vmatpush1.msra.mxu0 0.0
        %1340 = vmatprep.subr.mxu0 0.0
        %1341 = vmatpush1.msra.mxu0 0.0
        %1342 = vmatprep.subr.mxu0 0.0
        %1343 = vmatpush1.msra.mxu0 0.0
        %1344 = vmatprep.subr.mxu0 0.0
        %1345 = vmatpush1.msra.mxu0 0.0
        %1346 = vmatprep.subr.mxu0 0.0
        %1347 = vmatpush1.msra.mxu0 0.0
        %1348 = vmatprep.subr.mxu0 0.0
        %1349 = vmatpush1.msra.mxu0 0.0
        %1350 = vmatprep.subr.mxu0 0.0
        %1351 = vmatpush1.msra.mxu0 0.0
        %1352 = vmatprep.subr.mxu0 0.0
        %1353 = vmatpush1.msra.mxu0 0.0
        %1354 = vmatprep.subr.mxu0 0.0
        %1355 = vmatpush1.msra.mxu0 0.0
        %1356 = vmatprep.subr.mxu0 0.0
        %1357 = vmatpush1.msra.mxu0 0.0
        %1358 = vmatprep.subr.mxu0 0.0
        %1359 = vmatpush1.msra.mxu0 0.0
        %1360 = vmatprep.subr.mxu0 0.0
        %1361 = vmatpush1.msra.mxu0 0.0
        %1362 = vmatprep.subr.mxu0 0.0
        %1363 = vmatpush1.msra.mxu0 0.0
        %1364 = vmatprep.subr.mxu0 0.0
        %1365 = vmatpush1.msra.mxu0 0.0
        %1366 = vmatprep.mubr.f32.mxu0 0.0
        %1367 = vmatmul.mubr.f32.gmra.mrb[0].mxu0 %v1300
        %v1368 = vpop.f32.mrb[0].mxu0
        %v1369 = vadd.f32 0.0, %v1368
        %v1370 = vpop.f32.mrb[0].mxu0
        %1371 = vdwg.mxu0
        %1373 = vrot.lane.b32.xlu0 %v1037, 8
        %v1374 = vpop.permute.xlu0 %1373
        %1377 = vrot.lane.b32.xlu0 %v1203, 16
        %v1378 = vpop.permute.xlu0 %1377
        %1381 = vrot.lane.b32.xlu0 %v1369, 24
        %v1382 = vpop.permute.xlu0 %1381
        %v1384 = vsel %vm711, %v870, %v1374
        %vm1385 = vcmask 130048
        %v1386 = vsel %vm1385, %v1384, %v1378
        %vm1387 = vcmask 195584
        %v1388 = vsel %vm1387, %v1386, %v1382
        %v1389 = vld [vmem:[#allocation15] sm:$0xff]
        %v1390 = vld [vmem:[#allocation15 + $0x8] sm:$0xff]
        %v1391 = vld [vmem:[#allocation15 + $0x10] sm:$0xff]
        %v1392 = vld [vmem:[#allocation15 + $0x18] sm:$0xff]
        %v1393 = vld [vmem:[%s7] sm:$0x1]
        %v1395 = vlaneseq
        %v1396 = vshrl.u32 %v1395, 7
        %v1397 = vsub.s32 0, %v1396
        %v1398 = vrot.slane %v1393, %v1397
        %v1401 = vsel %vm635, %v1388, 0
        %1403 = vmatprep.subr.mxu0 0.0
        %1404 = vmatpush1.msra.mxu0 %v1389
        %1405 = vmatprep.subr.mxu0 0.0
        %1406 = vmatpush1.msra.mxu0 %v1390
        %1407 = vmatprep.subr.mxu0 0.0
        %1408 = vmatpush1.msra.mxu0 %v1391
        %1409 = vmatprep.subr.mxu0 0.0
        %1410 = vmatpush1.msra.mxu0 %v1392
        %1411 = vmatprep.subr.mxu0 0.0
        %1412 = vmatpush1.msra.mxu0 0.0
        %1413 = vmatprep.subr.mxu0 0.0
        %1414 = vmatpush1.msra.mxu0 0.0
        %1415 = vmatprep.subr.mxu0 0.0
        %1416 = vmatpush1.msra.mxu0 0.0
        %1417 = vmatprep.subr.mxu0 0.0
        %1418 = vmatpush1.msra.mxu0 0.0
        %1419 = vmatprep.subr.mxu0 0.0
        %1420 = vmatpush1.msra.mxu0 0.0
        %1421 = vmatprep.subr.mxu0 0.0
        %1422 = vmatpush1.msra.mxu0 0.0
        %1423 = vmatprep.subr.mxu0 0.0
        %1424 = vmatpush1.msra.mxu0 0.0
        %1425 = vmatprep.subr.mxu0 0.0
        %1426 = vmatpush1.msra.mxu0 0.0
        %1427 = vmatprep.subr.mxu0 0.0
        %1428 = vmatpush1.msra.mxu0 0.0
        %1429 = vmatprep.subr.mxu0 0.0
        %1430 = vmatpush1.msra.mxu0 0.0
        %1431 = vmatprep.subr.mxu0 0.0
        %1432 = vmatpush1.msra.mxu0 0.0
        %1433 = vmatprep.subr.mxu0 0.0
        %1434 = vmatpush1.msra.mxu0 0.0
        %1435 = vmatprep.subr.mxu0 0.0
        %1436 = vmatpush1.msra.mxu0 0.0
        %1437 = vmatprep.subr.mxu0 0.0
        %1438 = vmatpush1.msra.mxu0 0.0
        %1439 = vmatprep.subr.mxu0 0.0
        %1440 = vmatpush1.msra.mxu0 0.0
        %1441 = vmatprep.subr.mxu0 0.0
        %1442 = vmatpush1.msra.mxu0 0.0
        %1443 = vmatprep.subr.mxu0 0.0
        %1444 = vmatpush1.msra.mxu0 0.0
        %1445 = vmatprep.subr.mxu0 0.0
        %1446 = vmatpush1.msra.mxu0 0.0
        %1447 = vmatprep.subr.mxu0 0.0
        %1448 = vmatpush1.msra.mxu0 0.0
        %1449 = vmatprep.subr.mxu0 0.0
        %1450 = vmatpush1.msra.mxu0 0.0
        %1451 = vmatprep.subr.mxu0 0.0
        %1452 = vmatpush1.msra.mxu0 0.0
        %1453 = vmatprep.subr.mxu0 0.0
        %1454 = vmatpush1.msra.mxu0 0.0
        %1455 = vmatprep.subr.mxu0 0.0
        %1456 = vmatpush1.msra.mxu0 0.0
        %1457 = vmatprep.subr.mxu0 0.0
        %1458 = vmatpush1.msra.mxu0 0.0
        %1459 = vmatprep.subr.mxu0 0.0
        %1460 = vmatpush1.msra.mxu0 0.0
        %1461 = vmatprep.subr.mxu0 0.0
        %1462 = vmatpush1.msra.mxu0 0.0
        %1463 = vmatprep.subr.mxu0 0.0
        %1464 = vmatpush1.msra.mxu0 0.0
        %1465 = vmatprep.subr.mxu0 0.0
        %1466 = vmatpush1.msra.mxu0 0.0
        %1467 = vmatprep.mubr.f32.mxu0 0.0
        %1468 = vmatmul.mubr.f32.gmra.mrb[0].mxu0 %v1401
        %v1469 = vpop.f32.mrb[0].mxu0
        %v1470 = vadd.f32 %v1398, %v1469
        %v1471 = vpop.f32.mrb[0].mxu0
        %1472 = vdwg.mxu0
        %1473 = vst.msk [vmem:[%s466] sm:$0xff] %vm635, %v1470
        %s1474 = sand.u32 %s237, 1
        %s1475 = scalar_lea.sflag [#allocation6], %s1474
        %s1476 = sand.u32 %s237, 1
        %s1477 = smul.addr %s1476, 8
        %s1478 = scalar_lea.vmem [#allocation16], %s1477
        // Predicated region
        $region85: #{tpu_custom_call.1} parent=51 // pred_check
          %p1479 = pneg %p247
        $region86: #{tpu_custom_call.1} parent=51 // pred_check_branch
          %1481 = sbr.rel (%p1479) target = $region88
        $region87: #{tpu_custom_call.1} parent=51 // pred_region
          %s1483 = ssub.s32 128, 128
          %1484 = vsyncadd %s1475, %s1483
          %s1485 = sadd.s32 %s35, %s34
          %s1486 = smul.addr %s1485, 128
          %s1487 = scalar_lea.hbm %s8, %s1486
          %s1489 = sshll.u32 %s1478, 4
          %s1490 = int_to_ptr.vmem [resolvable:$true] %s1489
          %1492 = dma.vmem_to_hbm [thread:$0]  %s1490, 128, %s1487, %s1475
        $region88: #{tpu_custom_call.1} parent=51 // pred_fallthru
          _
      $region52: #{tpu_custom_call.1} parent=5 // pred_fallthru
        _
      %p1493 = scmp.le.s32.totalorder 2, %s25
      // Predicated region
      $region89: #{tpu_custom_call.1} parent=5 // pred_check
        %p1494 = pneg %p1493
      $region90: #{tpu_custom_call.1} parent=5 // pred_check_branch
        %1496 = sbr.rel (%p1494) target = $region92
      $region91: #{tpu_custom_call.1} parent=5 // pred_region
        %s1497 = ssub.s32 %s25, 2
        // Predicated region
        $region93: #{tpu_custom_call.1} parent=91 // pred_check
          %p1498 = pneg %p253
        $region94: #{tpu_custom_call.1} parent=91 // pred_check_branch
          %1500 = sbr.rel (%p1498) target = $region96
        $region95: #{tpu_custom_call.1} parent=91 // pred_region
          %s1501 = sand.u32 %s238, 1
          %s1502 = scalar_lea.sflag [#allocation6], %s1501
          %s1503 = sand.u32 %s238, 1
          %s1504 = smul.addr %s1503, 8
          %s1505 = scalar_lea.vmem [#allocation16], %s1504
          %1506 = dma.done %s1502, 128
        $region96: #{tpu_custom_call.1} parent=91 // pred_fallthru
          _
      $region92: #{tpu_custom_call.1} parent=5 // pred_fallthru
        _
    $region6: #{tpu_custom_call.1} parent=1 // loop_footer
      %s29 = sadd.s32 1, %s25
    $region7: #{tpu_custom_call.1} parent=1 // loop_footer_branch
      %24 = sbr.rel target = $region3
    $region8: #{tpu_custom_call.1} parent=1 // loop_exit
      _
    %1507 = vsyncpa [#allocation5], 1
    %s1508 = scalar_lea.sflag [#allocation5], 1
    %1509 = vsyncpa %s1508, 1
    %1510 = vsyncpa [#allocation8], 1
    %s1511 = scalar_lea.sflag [#allocation8], 1
    %1512 = vsyncpa %s1511, 1
    %1513 = vsyncpa [#allocation11], 1
    %1514 = vsyncpa [#allocation14], 1
    %1515 = vsyncpa [#allocation6], 1
    %s1516 = scalar_lea.sflag [#allocation6], 1
    %1517 = vsyncpa %s1516, 1

</llo_original>
